<compile_context>
chip_gen: v7x
topology: tpu7x:2x2x1
jax: 0.10.0
libtpu: 0.0.40
codegen_flags: <defaults>
</compile_context>

<pallas_src>
import functools

import jax
import jax.numpy as jnp
from jax.experimental import pallas as pl
from jax.experimental.pallas import tpu as pltpu

EPS = 1e-5      # PyTorch GroupNorm default eps
LANE = 128      # TPU lane width


def _round_up(v, m):
    return (v + m - 1) // m * m


def _silu(x):
    return x * jax.nn.sigmoid(x)


def _mlp(v, w1, b1, w2, b2):
    h = v @ w1 + b1
    return _silu(h) @ w2 + b2


def _groups_for(channels):
    # Mirrors `min(16, C // 4)` with the torch try/except Identity fallback.
    g = min(16, channels // 4)
    if g <= 0 or channels % g != 0:
        return 0
    return g


# --------------------------------------------------------------------------
# In-kernel helpers
# --------------------------------------------------------------------------
def _gn_silu(x, gamma, beta, G, cg, n, maskL):
    """GroupNorm (contiguous channel groups) + SiLU on a (C, Lp) fp32 tile.

    x must be exactly zero outside the first L columns so plain full-tile sums
    are the exact statistics (n = cg * L).  G == 0 means Identity norm.
    """
    if G == 0:
        h = _silu(x)
    else:
        inv_n = 1.0 / float(n)
        scales, shifts = [], []
        for g in range(G):
            blk = x[g * cg:(g + 1) * cg, :]                              # (cg, Lp)
            s1 = jnp.sum(jnp.sum(blk, axis=1, keepdims=True), axis=0, keepdims=True)
            s2 = jnp.sum(jnp.sum(blk * blk, axis=1, keepdims=True), axis=0, keepdims=True)
            mean = s1 * inv_n
            var = s2 * inv_n - mean * mean                               # biased, like torch
            inv = jax.lax.rsqrt(var + EPS)                               # (1, 1)
            sc = inv * gamma[g * cg:(g + 1) * cg, :]                     # (cg, 1)
            scales.append(sc)
            shifts.append(beta[g * cg:(g + 1) * cg, :] - mean * sc)
        scale = jnp.concatenate(scales, axis=0) if G > 1 else scales[0]  # (C, 1)
        shift = jnp.concatenate(shifts, axis=0) if G > 1 else shifts[0]
        h = _silu(x * scale + shift)
    if maskL is not None:
        h = h * maskL
    return h


def _stack_taps(h, K, pad, L, Lp, col, need_mask):
    """Stack the K tap-shifted copies of h (C, Lp) along sublanes -> (K*C, Lp) fp32."""
    parts = []
    for k in range(K):
        sh = pad - k
        r = h if sh == 0 else pltpu.roll(h, sh % Lp, axis=1)
        if need_mask and sh != 0:
            # Zero the wrap-contaminated head/tail columns of this segment.
            keep = jnp.logical_and(col >= sh, col < L + sh)              # (1, Lp)
            r = jnp.where(keep, r, 0.0)
        parts.append(r)
    return jnp.concatenate(parts, axis=0) if K > 1 else parts[0]


def _fused_kernel(*refs, Bt, K, L, Lp, in_c, skip_c, tcc, out_c,
                  G1, cg1, G2, cg2, res_mode):
    it = iter(refs)
    x_ref = next(it)
    skip_ref = next(it) if skip_c else None
    tc_ref = next(it) if tcc else None
    mod_ref = next(it)
    gn1_ref = next(it)
    chp_ref = next(it)
    w1_ref = next(it)
    w2_ref = next(it)
    wres_ref = next(it) if res_mode == "conv1x1" else None
    o_ref = next(it)
    xcat_s = next(it)                                                    # (C1, Lp) VMEM

    C1 = in_c + skip_c + tcc
    pad = K // 2
    col = jax.lax.broadcasted_iota(jnp.int32, (1, Lp), 1)
    maskL = (col < L).astype(jnp.float32) if L < Lp else None
    need_tap_mask = (Lp - L) < pad

    gn1 = gn1_ref[...]                                                   # (C1, 2)
    g1g, g1b = gn1[:, 0:1], gn1[:, 1:2]
    chp = chp_ref[...]                                                   # (out_c, 5)
    b1, g2g, g2b, b2, bres = (chp[:, 0:1], chp[:, 1:2], chp[:, 2:3],
                              chp[:, 3:4], chp[:, 4:5])

    # Zero the conv 'same' padding region of the assembly scratch once per step.
    if L < Lp:
        xcat_s[:, L:] = jnp.zeros((C1, Lp - L), jnp.float32)

    # ---- GroupNorm1 + SiLU + tap stacking, per sample (all VMEM resident) ----
    rhs1 = []
    for b in range(Bt):
        xcat_s[0:in_c, 0:L] = x_ref[b]
        if skip_ref is not None:
            xcat_s[in_c:in_c + skip_c, 0:L] = skip_ref[b]
        if tc_ref is not None:
            xcat_s[in_c + skip_c:C1, 0:L] = tc_ref[b]
        h1 = _gn_silu(xcat_s[...], g1g, g1b, G1, cg1, cg1 * L, maskL)
        rhs1.append(_stack_taps(h1, K, pad, L, Lp, col, need_tap_mask))
    rhs1 = (jnp.concatenate(rhs1, axis=1) if Bt > 1 else rhs1[0]).astype(jnp.bfloat16)

    # conv1 as one wide MXU matmul over all Bt samples (fp32 accumulation) + bias.
    acc = jnp.dot(w1_ref[...], rhs1, preferred_element_type=jnp.float32) + b1

    # ---- folded time*cond FiLM + GroupNorm2 + SiLU + tap stacking ----
    rhs2 = []
    for b in range(Bt):
        m = mod_ref[b]                                                   # (out_c, 2)
        a = acc[:, b * Lp:(b + 1) * Lp] * m[:, 0:1] + m[:, 1:2]
        if maskL is not None:
            a = a * maskL                                                # exact GN2 stats
        h2 = _gn_silu(a, g2g, g2b, G2, cg2, cg2 * L, maskL)
        rhs2.append(_stack_taps(h2, K, pad, L, Lp, col, need_tap_mask))
    rhs2 = (jnp.concatenate(rhs2, axis=1) if Bt > 1 else rhs2[0]).astype(jnp.bfloat16)

    out = jnp.dot(w2_ref[...], rhs2, preferred_element_type=jnp.float32) + b2

    # ---- residual + store true-length slices ----
    for b in range(Bt):
        val = out[:, b * Lp:b * Lp + L]
        if res_mode == "conv1x1":
            res = jnp.dot(wres_ref[...], x_ref[b].astype(jnp.bfloat16),
                          preferred_element_type=jnp.float32)
            val = val + res + bres
        elif res_mode == "identity":
            val = val + x_ref[b]
        o_ref[b] = val


# --------------------------------------------------------------------------
# Batch-tile / VMEM sizing
# --------------------------------------------------------------------------
def _per_sample_vmem(C1, out_c, K, Lp):
    # fp32 wide intermediates (stacked taps x2, acc, out, xcat) + their bf16 copies.
    return Lp * (4 * (K * C1 + K * out_c + 2 * out_c + C1) + 2 * (K * C1 + K * out_c))


def _pick_bt(B, C1, out_c, K, Lp, budget=20 << 20):
    per = _per_sample_vmem(C1, out_c, K, Lp)
    best = 1
    for bt in range(1, min(B, 8) + 1):
        if B % bt == 0 and bt * per <= budget:
            best = bt
    return best


def _vmem_limit(Bt, C1, out_c, K, L, Lp, in_c):
    io = Bt * 4 * (C1 * L + out_c * L + out_c * 2)
    prm = 4 * (C1 * 2 + out_c * 5) + 2 * out_c * (K * C1 + K * out_c + in_c)
    est = 2 * (io + prm) + Bt * _per_sample_vmem(C1, out_c, K, Lp) + 4 * C1 * Lp + (8 << 20)
    return int(min(max(est, 16 << 20), 64 << 20))


# --------------------------------------------------------------------------
# Parameter init (deterministic synthetic weights; matches module shapes)
# --------------------------------------------------------------------------
def init_params(key, cfg):
    in_c, out_c, K = cfg["in_c"], cfg["out_c"], cfg["kernel_size"]
    C1 = in_c + cfg["skip_channels"] + cfg["time_cond_channels"]
    ks = jax.random.split(key, 18)
    s = 0.1
    H = 128
    p = {}
    p["gn1_gamma"] = 1.0 + s * jax.random.normal(ks[0], (C1, 1), jnp.float32)
    p["gn1_beta"] = s * jax.random.normal(ks[1], (C1, 1), jnp.float32)
    p["gn2_gamma"] = 1.0 + s * jax.random.normal(ks[2], (out_c, 1), jnp.float32)
    p["gn2_beta"] = s * jax.random.normal(ks[3], (out_c, 1), jnp.float32)
    # conv weights flattened tap-major: element [o, k*Cin + c] == w[o, c, k]; bf16 for MXU
    w1 = jax.random.normal(ks[4], (out_c, C1, K), jnp.float32) * s
    p["conv1_w"] = jnp.transpose(w1, (0, 2, 1)).reshape(out_c, K * C1).astype(jnp.bfloat16)
    p["conv1_b"] = s * jax.random.normal(ks[5], (out_c, 1), jnp.float32)
    w2 = jax.random.normal(ks[6], (out_c, out_c, K), jnp.float32) * s
    p["conv2_w"] = jnp.transpose(w2, (0, 2, 1)).reshape(out_c, K * out_c).astype(jnp.bfloat16)
    p["conv2_b"] = s * jax.random.normal(ks[7], (out_c, 1), jnp.float32)
    # time_mlp: Linear(time_channels, 128) -> SiLU -> Linear(128, 2*out_c)
    tc = cfg["time_channels"]
    p["t_w1"] = jax.random.normal(ks[8], (tc, H), jnp.float32) * s
    p["t_b1"] = jax.random.normal(ks[9], (H,), jnp.float32) * s
    p["t_w2"] = jax.random.normal(ks[10], (H, 2 * out_c), jnp.float32) * s
    p["t_b2"] = jax.random.normal(ks[11], (2 * out_c,), jnp.float32) * s
    if cfg["cond_channels"] > 0:
        cc = cfg["cond_channels"]
        p["c_w1"] = jax.random.normal(ks[12], (cc, H), jnp.float32) * s
        p["c_b1"] = jax.random.normal(ks[13], (H,), jnp.float32) * s
        p["c_w2"] = jax.random.normal(ks[14], (H, 2 * out_c), jnp.float32) * s
        p["c_b2"] = jax.random.normal(ks[15], (2 * out_c,), jnp.float32) * s
    if cfg["skip_channels"] > 0:
        p["to_out_w"] = (jax.random.normal(ks[16], (out_c, in_c), jnp.float32) * s
                         ).astype(jnp.bfloat16)
        p["to_out_b"] = s * jax.random.normal(ks[17], (out_c, 1), jnp.float32)
    return p


# --------------------------------------------------------------------------
# Forward pass (mirrors ConvBlock1D.forward)
# --------------------------------------------------------------------------
def conv_block_forward(params, cfg, x, time, skip=None, cond=None, time_cond=None):
    B, in_c, L = x.shape
    out_c, K = cfg["out_c"], cfg["kernel_size"]
    assert K % 2 == 1, "even kernel_size not supported"
    skip_c = skip.shape[1] if skip is not None else 0
    tcc = time_cond.shape[1] if time_cond is not None else 0
    assert skip_c == cfg["skip_channels"] and tcc == cfg["time_cond_channels"]
    C1 = in_c + skip_c + tcc
    pad = K // 2
    Lp = _round_up(L, LANE)

    G1 = _groups_for(C1)
    cg1 = C1 // G1 if G1 else C1
    G2 = _groups_for(out_c)
    cg2 = out_c // G2 if G2 else out_c

    if cfg["res"]:
        if skip_c > 0:
            res_mode = "conv1x1"
        else:
            assert in_c == out_c, "identity residual requires in_c == out_c"
            res_mode = "identity"
    else:
        res_mode = "none"

    # --- tiny time/cond MLPs stay in XLA; both FiLMs folded into one mul/add ---
    t = _mlp(time, params["t_w1"], params["t_b1"], params["t_w2"], params["t_b2"])
    tm, ta = t[:, :out_c], t[:, out_c:]
    if cfg["cond_channels"] > 0:
        c = _mlp(cond, params["c_w1"], params["c_b1"], params["c_w2"], params["c_b2"])
        cm, ca = c[:, :out_c], c[:, out_c:]
        mod_mul, mod_add = tm * cm, ta * cm + ca          # (x*tm + ta)*cm + ca
    else:
        mod_mul, mod_add = tm, ta
    mod = jnp.stack([mod_mul, mod_add], axis=-1)          # (B, out_c, 2)

    # --- pack the tiny per-channel params into two lane-stacked arrays ---
    gn1_p = jnp.concatenate([params["gn1_gamma"], params["gn1_beta"]], axis=1)     # (C1, 2)
    bres = params["to_out_b"] if skip_c > 0 else jnp.zeros((out_c, 1), jnp.float32)
    chan_p = jnp.concatenate([params["conv1_b"], params["gn2_gamma"],
                              params["gn2_beta"], params["conv2_b"], bres], axis=1)  # (out_c, 5)

    Bt = _pick_bt(B, C1, out_c, K, Lp)
    grid = (B // Bt,)

    in_arrays = [x]
    in_specs = [pl.BlockSpec((Bt, in_c, L), lambda i: (i, 0, 0))]
    if skip_c:
        in_arrays.append(skip)
        in_specs.append(pl.BlockSpec((Bt, skip_c, L), lambda i: (i, 0, 0)))
    if tcc:
        in_arrays.append(time_cond)
        in_specs.append(pl.BlockSpec((Bt, tcc, L), lambda i: (i, 0, 0)))
    in_arrays += [mod, gn1_p, chan_p, params["conv1_w"], params["conv2_w"]]
    in_specs += [pl.BlockSpec((Bt, out_c, 2), lambda i: (i, 0, 0)),
                 pl.BlockSpec((C1, 2), lambda i: (0, 0)),
                 pl.BlockSpec((out_c, 5), lambda i: (0, 0)),
                 pl.BlockSpec((out_c, K * C1), lambda i: (0, 0)),
                 pl.BlockSpec((out_c, K * out_c), lambda i: (0, 0))]
    if res_mode == "conv1x1":
        in_arrays.append(params["to_out_w"])
        in_specs.append(pl.BlockSpec((out_c, in_c), lambda i: (0, 0)))

    kern = functools.partial(
        _fused_kernel, Bt=Bt, K=K, L=L, Lp=Lp, in_c=in_c, skip_c=skip_c, tcc=tcc,
        out_c=out_c, G1=G1, cg1=cg1, G2=G2, cg2=cg2, res_mode=res_mode)

    return pl.pallas_call(
        kern,
        out_shape=jax.ShapeDtypeStruct((B, out_c, L), jnp.float32),
        grid=grid,
        in_specs=in_specs,
        out_specs=pl.BlockSpec((Bt, out_c, L), lambda i: (i, 0, 0)),
        scratch_shapes=[pltpu.VMEM((C1, Lp), jnp.float32)],
        compiler_params=pltpu.CompilerParams(
            dimension_semantics=("parallel",),
            vmem_limit_bytes=_vmem_limit(Bt, C1, out_c, K, L, Lp, in_c)),
    )(*in_arrays)


# --------------------------------------------------------------------------
# Pure-JAX reference (same bf16-rounded weights) for a correctness check
# --------------------------------------------------------------------------
def reference_forward(params, cfg, x, time, skip=None, cond=None, time_cond=None):
    out_c, K = cfg["out_c"], cfg["kernel_size"]
    pad = K // 2
    B, in_c, L = x.shape
    xs = [x]
    if skip is not None:
        xs.append(skip)
    if time_cond is not None:
        xs.append(time_cond)
    h = jnp.concatenate(xs, axis=1) if len(xs) > 1 else x

    def gn(v, gamma, beta):
        C = v.shape[1]
        G = _groups_for(C)
        if G == 0:
            return v
        vg = v.reshape(B, G, (C // G) * L)
        mean = vg.mean(axis=2, keepdims=True)
        var = jnp.mean((vg - mean) ** 2, axis=2, keepdims=True)
        vn = ((vg - mean) * jax.lax.rsqrt(var + EPS)).reshape(B, C, L)
        return vn * gamma.reshape(1, C, 1) + beta.reshape(1, C, 1)

    def conv(v, w_flat, bias):
        vb = jnp.pad(v.astype(jnp.bfloat16), ((0, 0), (0, 0), (pad, pad)))
        taps = jnp.concatenate([vb[:, :, k:k + L] for k in range(K)], axis=1)
        y = jnp.einsum('ok,bkl->bol', w_flat, taps, preferred_element_type=jnp.float32)
        return y + bias.reshape(1, out_c, 1)

    h = _silu(gn(h, params["gn1_gamma"], params["gn1_beta"]))
    h = conv(h, params["conv1_w"], params["conv1_b"])
    t = _mlp(time, params["t_w1"], params["t_b1"], params["t_w2"], params["t_b2"])
    h = h * t[:, :out_c, None] + t[:, out_c:, None]
    if cfg["cond_channels"] > 0:
        c = _mlp(cond, params["c_w1"], params["c_b1"], params["c_w2"], params["c_b2"])
        h = h * c[:, :out_c, None] + c[:, out_c:, None]
    h = _silu(gn(h, params["gn2_gamma"], params["gn2_beta"]))
    h = conv(h, params["conv2_w"], params["conv2_b"])
    if cfg["res"]:
        if cfg["skip_channels"] > 0:
            res = jnp.einsum('oc,bcl->bol', params["to_out_w"], x.astype(jnp.bfloat16),
                             preferred_element_type=jnp.float32)
            res = res + params["to_out_b"].reshape(1, out_c, 1)
        else:
            res = x
        h = h + res
    return h


if __name__ == "__main__":
    cfg = dict(in_c=8, out_c=8, skip_channels=4, time_cond_channels=4,
               time_channels=16, cond_channels=8, kernel_size=3, res=True)
    B, L = 2, 16

    key = jax.random.PRNGKey(0)
    kp, kx = jax.random.split(key)
    params = init_params(kp, cfg)

    ks = jax.random.split(kx, 5)
    x = jax.random.normal(ks[0], (B, cfg["in_c"], L), jnp.float32)
    skip = jax.random.normal(ks[1], (B, cfg["skip_channels"], L), jnp.float32)
    time_cond = jax.random.normal(ks[2], (B, cfg["time_cond_channels"], L), jnp.float32)
    time = jax.random.normal(ks[3], (B, cfg["time_channels"]), jnp.float32)
    cond = jax.random.normal(ks[4], (B, cfg["cond_channels"]), jnp.float32)

    fwd = jax.jit(lambda p, xx, tt, sk, cc, tc: conv_block_forward(
        p, cfg, xx, tt, skip=sk, cond=cc, time_cond=tc))
    out = jax.block_until_ready(fwd(params, x, time, skip, cond, time_cond))
    assert out.shape == (B, cfg["out_c"], L), out.shape
    assert bool(jnp.all(jnp.isfinite(out)))

    ref = reference_forward(params, cfg, x, time, skip=skip, cond=cond,
                            time_cond=time_cond)
    err = float(jnp.max(jnp.abs(out - ref)))
    assert err < 2e-2, f"max |kernel - reference| = {err}"
    print("KERNEL_OK")
</pallas_src>

<mosaic_0001>
module attributes {stable_mosaic.version = 11 : i64} {
  func.func @_fused_kernel(%arg0: i32, %arg1: memref<2x8x16xf32, #tpu.memory_space<vmem>>, %arg2: memref<2x4x16xf32, #tpu.memory_space<vmem>>, %arg3: memref<2x4x16xf32, #tpu.memory_space<vmem>>, %arg4: memref<2x8x2xf32, #tpu.memory_space<vmem>>, %arg5: memref<16x2xf32, #tpu.memory_space<vmem>>, %arg6: memref<8x5xf32, #tpu.memory_space<vmem>>, %arg7: memref<8x48xbf16, #tpu.memory_space<vmem>>, %arg8: memref<8x24xbf16, #tpu.memory_space<vmem>>, %arg9: memref<8x8xbf16, #tpu.memory_space<vmem>>, %arg10: memref<2x8x16xf32, #tpu.memory_space<vmem>>, %arg11: memref<16x128xf32, #tpu.memory_space<vmem>>) attributes {dimension_semantics = [#tpu.dimension_semantics<parallel>], iteration_bounds = array<i64: 1>, scalar_prefetch = 0 : i64, scratch_operands = 1 : i64, tpu.core_type = #tpu.core_type<tc>, window_params = [{transform_indices = @transform_0, window_bounds = array<i64: 2, 8, 16>}, {transform_indices = @transform_1, window_bounds = array<i64: 2, 4, 16>}, {transform_indices = @transform_2, window_bounds = array<i64: 2, 4, 16>}, {transform_indices = @transform_3, window_bounds = array<i64: 2, 8, 2>}, {pipeline_mode = #tpu.pipeline_mode<synchronous>, transform_indices = @transform_4, window_bounds = array<i64: 16, 2>}, {pipeline_mode = #tpu.pipeline_mode<synchronous>, transform_indices = @transform_5, window_bounds = array<i64: 8, 5>}, {pipeline_mode = #tpu.pipeline_mode<synchronous>, transform_indices = @transform_6, window_bounds = array<i64: 8, 48>}, {pipeline_mode = #tpu.pipeline_mode<synchronous>, transform_indices = @transform_7, window_bounds = array<i64: 8, 24>}, {pipeline_mode = #tpu.pipeline_mode<synchronous>, transform_indices = @transform_8, window_bounds = array<i64: 8, 8>}, {transform_indices = @transform_9, window_bounds = array<i64: 2, 8, 16>}]} {
    %0 = tpu.iota {dimensions = array<i32: 1>} : vector<1x128xi32>
    %c16_i32 = arith.constant 16 : i32
    %1 = vector.broadcast %c16_i32 : i32 to vector<1x128xi32>
    %2 = arith.cmpi slt, %0, %1 : vector<1x128xi32>
    %3 = arith.extui %2 : vector<1x128xi1> to vector<1x128xi32>
    %4 = arith.sitofp %3 : vector<1x128xi32> to vector<1x128xf32>
    %c0 = arith.constant 0 : index
    %c0_0 = arith.constant 0 : index
    %5 = vector.load %arg5[%c0, %c0_0] : memref<16x2xf32, #tpu.memory_space<vmem>>, vector<16x2xf32>
    %6 = vector.extract_strided_slice %5 {offsets = [0, 0], sizes = [16, 1], strides = [1, 1]} : vector<16x2xf32> to vector<16x1xf32>
    %7 = vector.extract_strided_slice %5 {offsets = [0, 1], sizes = [16, 1], strides = [1, 1]} : vector<16x2xf32> to vector<16x1xf32>
    %c0_1 = arith.constant 0 : index
    %c0_2 = arith.constant 0 : index
    %8 = vector.load %arg6[%c0_1, %c0_2] : memref<8x5xf32, #tpu.memory_space<vmem>>, vector<8x5xf32>
    %9 = vector.extract_strided_slice %8 {offsets = [0, 0], sizes = [8, 1], strides = [1, 1]} : vector<8x5xf32> to vector<8x1xf32>
    %10 = vector.extract_strided_slice %8 {offsets = [0, 1], sizes = [8, 1], strides = [1, 1]} : vector<8x5xf32> to vector<8x1xf32>
    %11 = vector.extract_strided_slice %8 {offsets = [0, 2], sizes = [8, 1], strides = [1, 1]} : vector<8x5xf32> to vector<8x1xf32>
    %12 = vector.extract_strided_slice %8 {offsets = [0, 3], sizes = [8, 1], strides = [1, 1]} : vector<8x5xf32> to vector<8x1xf32>
    %13 = vector.extract_strided_slice %8 {offsets = [0, 4], sizes = [8, 1], strides = [1, 1]} : vector<8x5xf32> to vector<8x1xf32>
    %cst = arith.constant 0.000000e+00 : f32
    %14 = vector.broadcast %cst : f32 to vector<16x112xf32>
    %c0_3 = arith.constant 0 : index
    %c16 = arith.constant 16 : index
    %15 = vector.load %arg11[%c0_3, %c16] : memref<16x128xf32, #tpu.memory_space<vmem>>, vector<16x112xf32>
    tpu.vector_store %arg11[%c0_3, %c16], %14 {strides = array<i32>} : memref<16x128xf32, #tpu.memory_space<vmem>>, vector<16x112xf32>,
    %c0_4 = arith.constant 0 : index
    %c0_5 = arith.constant 0 : index
    %c0_6 = arith.constant 0 : index
    %16 = vector.load %arg1[%c0_4, %c0_5, %c0_6] : memref<2x8x16xf32, #tpu.memory_space<vmem>>, vector<1x8x16xf32>
    %17 = vector.shape_cast %16 : vector<1x8x16xf32> to vector<8x16xf32>
    %c0_7 = arith.constant 0 : index
    %c0_8 = arith.constant 0 : index
    %18 = vector.load %arg11[%c0_7, %c0_8] : memref<16x128xf32, #tpu.memory_space<vmem>>, vector<8x16xf32>
    tpu.vector_store %arg11[%c0_7, %c0_8], %17 {strides = array<i32>} : memref<16x128xf32, #tpu.memory_space<vmem>>, vector<8x16xf32>,
    %c0_9 = arith.constant 0 : index
    %c0_10 = arith.constant 0 : index
    %c0_11 = arith.constant 0 : index
    %19 = vector.load %arg2[%c0_9, %c0_10, %c0_11] : memref<2x4x16xf32, #tpu.memory_space<vmem>>, vector<1x4x16xf32>
    %20 = vector.shape_cast %19 : vector<1x4x16xf32> to vector<4x16xf32>
    %c8 = arith.constant 8 : index
    %c0_12 = arith.constant 0 : index
    %21 = vector.load %arg11[%c8, %c0_12] : memref<16x128xf32, #tpu.memory_space<vmem>>, vector<4x16xf32>
    tpu.vector_store %arg11[%c8, %c0_12], %20 {strides = array<i32>} : memref<16x128xf32, #tpu.memory_space<vmem>>, vector<4x16xf32>,
    %c0_13 = arith.constant 0 : index
    %c0_14 = arith.constant 0 : index
    %c0_15 = arith.constant 0 : index
    %22 = vector.load %arg3[%c0_13, %c0_14, %c0_15] : memref<2x4x16xf32, #tpu.memory_space<vmem>>, vector<1x4x16xf32>
    %23 = vector.shape_cast %22 : vector<1x4x16xf32> to vector<4x16xf32>
    %c12 = arith.constant 12 : index
    %c0_16 = arith.constant 0 : index
    %24 = vector.load %arg11[%c12, %c0_16] : memref<16x128xf32, #tpu.memory_space<vmem>>, vector<4x16xf32>
    tpu.vector_store %arg11[%c12, %c0_16], %23 {strides = array<i32>} : memref<16x128xf32, #tpu.memory_space<vmem>>, vector<4x16xf32>,
    %c0_17 = arith.constant 0 : index
    %c0_18 = arith.constant 0 : index
    %25 = vector.load %arg11[%c0_17, %c0_18] : memref<16x128xf32, #tpu.memory_space<vmem>>, vector<16x128xf32>
    %26 = vector.extract_strided_slice %25 {offsets = [0, 0], sizes = [4, 128], strides = [1, 1]} : vector<16x128xf32> to vector<4x128xf32>
    %cst_19 = arith.constant dense<0.000000e+00> : vector<4xf32>
    %27 = vector.multi_reduction <add>, %26, %cst_19 [1] : vector<4x128xf32> to vector<4xf32>
    %28 = vector.shape_cast %27 : vector<4xf32> to vector<4x1xf32>
    %cst_20 = arith.constant dense<0.000000e+00> : vector<1xf32>
    %29 = vector.multi_reduction <add>, %28, %cst_20 [0] : vector<4x1xf32> to vector<1xf32>
    %30 = vector.shape_cast %29 : vector<1xf32> to vector<1x1xf32>
    %31 = arith.mulf %26, %26 : vector<4x128xf32>
    %cst_21 = arith.constant dense<0.000000e+00> : vector<4xf32>
    %32 = vector.multi_reduction <add>, %31, %cst_21 [1] : vector<4x128xf32> to vector<4xf32>
    %33 = vector.shape_cast %32 : vector<4xf32> to vector<4x1xf32>
    %cst_22 = arith.constant dense<0.000000e+00> : vector<1xf32>
    %34 = vector.multi_reduction <add>, %33, %cst_22 [0] : vector<4x1xf32> to vector<1xf32>
    %35 = vector.shape_cast %34 : vector<1xf32> to vector<1x1xf32>
    %cst_23 = arith.constant 1.562500e-02 : f32
    %36 = vector.broadcast %cst_23 : f32 to vector<1x1xf32>
    %37 = arith.mulf %30, %36 : vector<1x1xf32>
    %cst_24 = arith.constant 1.562500e-02 : f32
    %38 = vector.broadcast %cst_24 : f32 to vector<1x1xf32>
    %39 = arith.mulf %35, %38 : vector<1x1xf32>
    %40 = arith.mulf %37, %37 : vector<1x1xf32>
    %41 = arith.subf %39, %40 : vector<1x1xf32>
    %cst_25 = arith.constant 9.99999974E-6 : f32
    %42 = vector.broadcast %cst_25 : f32 to vector<1x1xf32>
    %43 = arith.addf %41, %42 : vector<1x1xf32>
    %44 = math.rsqrt %43 : vector<1x1xf32>
    %45 = vector.extract_strided_slice %6 {offsets = [0, 0], sizes = [4, 1], strides = [1, 1]} : vector<16x1xf32> to vector<4x1xf32>
    %46 = vector.broadcast %44 : vector<1x1xf32> to vector<4x1xf32>
    %47 = arith.mulf %46, %45 : vector<4x1xf32>
    %48 = vector.extract_strided_slice %7 {offsets = [0, 0], sizes = [4, 1], strides = [1, 1]} : vector<16x1xf32> to vector<4x1xf32>
    %49 = vector.broadcast %37 : vector<1x1xf32> to vector<4x1xf32>
    %50 = arith.mulf %49, %47 : vector<4x1xf32>
    %51 = arith.subf %48, %50 : vector<4x1xf32>
    %52 = vector.extract_strided_slice %25 {offsets = [4, 0], sizes = [4, 128], strides = [1, 1]} : vector<16x128xf32> to vector<4x128xf32>
    %cst_26 = arith.constant dense<0.000000e+00> : vector<4xf32>
    %53 = vector.multi_reduction <add>, %52, %cst_26 [1] : vector<4x128xf32> to vector<4xf32>
    %54 = vector.shape_cast %53 : vector<4xf32> to vector<4x1xf32>
    %cst_27 = arith.constant dense<0.000000e+00> : vector<1xf32>
    %55 = vector.multi_reduction <add>, %54, %cst_27 [0] : vector<4x1xf32> to vector<1xf32>
    %56 = vector.shape_cast %55 : vector<1xf32> to vector<1x1xf32>
    %57 = arith.mulf %52, %52 : vector<4x128xf32>
    %cst_28 = arith.constant dense<0.000000e+00> : vector<4xf32>
    %58 = vector.multi_reduction <add>, %57, %cst_28 [1] : vector<4x128xf32> to vector<4xf32>
    %59 = vector.shape_cast %58 : vector<4xf32> to vector<4x1xf32>
    %cst_29 = arith.constant dense<0.000000e+00> : vector<1xf32>
    %60 = vector.multi_reduction <add>, %59, %cst_29 [0] : vector<4x1xf32> to vector<1xf32>
    %61 = vector.shape_cast %60 : vector<1xf32> to vector<1x1xf32>
    %cst_30 = arith.constant 1.562500e-02 : f32
    %62 = vector.broadcast %cst_30 : f32 to vector<1x1xf32>
    %63 = arith.mulf %56, %62 : vector<1x1xf32>
    %cst_31 = arith.constant 1.562500e-02 : f32
    %64 = vector.broadcast %cst_31 : f32 to vector<1x1xf32>
    %65 = arith.mulf %61, %64 : vector<1x1xf32>
    %66 = arith.mulf %63, %63 : vector<1x1xf32>
    %67 = arith.subf %65, %66 : vector<1x1xf32>
    %cst_32 = arith.constant 9.99999974E-6 : f32
    %68 = vector.broadcast %cst_32 : f32 to vector<1x1xf32>
    %69 = arith.addf %67, %68 : vector<1x1xf32>
    %70 = math.rsqrt %69 : vector<1x1xf32>
    %71 = vector.extract_strided_slice %6 {offsets = [4, 0], sizes = [4, 1], strides = [1, 1]} : vector<16x1xf32> to vector<4x1xf32>
    %72 = vector.broadcast %70 : vector<1x1xf32> to vector<4x1xf32>
    %73 = arith.mulf %72, %71 : vector<4x1xf32>
    %74 = vector.extract_strided_slice %7 {offsets = [4, 0], sizes = [4, 1], strides = [1, 1]} : vector<16x1xf32> to vector<4x1xf32>
    %75 = vector.broadcast %63 : vector<1x1xf32> to vector<4x1xf32>
    %76 = arith.mulf %75, %73 : vector<4x1xf32>
    %77 = arith.subf %74, %76 : vector<4x1xf32>
    %78 = vector.extract_strided_slice %25 {offsets = [8, 0], sizes = [4, 128], strides = [1, 1]} : vector<16x128xf32> to vector<4x128xf32>
    %cst_33 = arith.constant dense<0.000000e+00> : vector<4xf32>
    %79 = vector.multi_reduction <add>, %78, %cst_33 [1] : vector<4x128xf32> to vector<4xf32>
    %80 = vector.shape_cast %79 : vector<4xf32> to vector<4x1xf32>
    %cst_34 = arith.constant dense<0.000000e+00> : vector<1xf32>
    %81 = vector.multi_reduction <add>, %80, %cst_34 [0] : vector<4x1xf32> to vector<1xf32>
    %82 = vector.shape_cast %81 : vector<1xf32> to vector<1x1xf32>
    %83 = arith.mulf %78, %78 : vector<4x128xf32>
    %cst_35 = arith.constant dense<0.000000e+00> : vector<4xf32>
    %84 = vector.multi_reduction <add>, %83, %cst_35 [1] : vector<4x128xf32> to vector<4xf32>
    %85 = vector.shape_cast %84 : vector<4xf32> to vector<4x1xf32>
    %cst_36 = arith.constant dense<0.000000e+00> : vector<1xf32>
    %86 = vector.multi_reduction <add>, %85, %cst_36 [0] : vector<4x1xf32> to vector<1xf32>
    %87 = vector.shape_cast %86 : vector<1xf32> to vector<1x1xf32>
    %cst_37 = arith.constant 1.562500e-02 : f32
    %88 = vector.broadcast %cst_37 : f32 to vector<1x1xf32>
    %89 = arith.mulf %82, %88 : vector<1x1xf32>
    %cst_38 = arith.constant 1.562500e-02 : f32
    %90 = vector.broadcast %cst_38 : f32 to vector<1x1xf32>
    %91 = arith.mulf %87, %90 : vector<1x1xf32>
    %92 = arith.mulf %89, %89 : vector<1x1xf32>
    %93 = arith.subf %91, %92 : vector<1x1xf32>
    %cst_39 = arith.constant 9.99999974E-6 : f32
    %94 = vector.broadcast %cst_39 : f32 to vector<1x1xf32>
    %95 = arith.addf %93, %94 : vector<1x1xf32>
    %96 = math.rsqrt %95 : vector<1x1xf32>
    %97 = vector.extract_strided_slice %6 {offsets = [8, 0], sizes = [4, 1], strides = [1, 1]} : vector<16x1xf32> to vector<4x1xf32>
    %98 = vector.broadcast %96 : vector<1x1xf32> to vector<4x1xf32>
    %99 = arith.mulf %98, %97 : vector<4x1xf32>
    %100 = vector.extract_strided_slice %7 {offsets = [8, 0], sizes = [4, 1], strides = [1, 1]} : vector<16x1xf32> to vector<4x1xf32>
    %101 = vector.broadcast %89 : vector<1x1xf32> to vector<4x1xf32>
    %102 = arith.mulf %101, %99 : vector<4x1xf32>
    %103 = arith.subf %100, %102 : vector<4x1xf32>
    %104 = vector.extract_strided_slice %25 {offsets = [12, 0], sizes = [4, 128], strides = [1, 1]} : vector<16x128xf32> to vector<4x128xf32>
    %cst_40 = arith.constant dense<0.000000e+00> : vector<4xf32>
    %105 = vector.multi_reduction <add>, %104, %cst_40 [1] : vector<4x128xf32> to vector<4xf32>
    %106 = vector.shape_cast %105 : vector<4xf32> to vector<4x1xf32>
    %cst_41 = arith.constant dense<0.000000e+00> : vector<1xf32>
    %107 = vector.multi_reduction <add>, %106, %cst_41 [0] : vector<4x1xf32> to vector<1xf32>
    %108 = vector.shape_cast %107 : vector<1xf32> to vector<1x1xf32>
    %109 = arith.mulf %104, %104 : vector<4x128xf32>
    %cst_42 = arith.constant dense<0.000000e+00> : vector<4xf32>
    %110 = vector.multi_reduction <add>, %109, %cst_42 [1] : vector<4x128xf32> to vector<4xf32>
    %111 = vector.shape_cast %110 : vector<4xf32> to vector<4x1xf32>
    %cst_43 = arith.constant dense<0.000000e+00> : vector<1xf32>
    %112 = vector.multi_reduction <add>, %111, %cst_43 [0] : vector<4x1xf32> to vector<1xf32>
    %113 = vector.shape_cast %112 : vector<1xf32> to vector<1x1xf32>
    %cst_44 = arith.constant 1.562500e-02 : f32
    %114 = vector.broadcast %cst_44 : f32 to vector<1x1xf32>
    %115 = arith.mulf %108, %114 : vector<1x1xf32>
    %cst_45 = arith.constant 1.562500e-02 : f32
    %116 = vector.broadcast %cst_45 : f32 to vector<1x1xf32>
    %117 = arith.mulf %113, %116 : vector<1x1xf32>
    %118 = arith.mulf %115, %115 : vector<1x1xf32>
    %119 = arith.subf %117, %118 : vector<1x1xf32>
    %cst_46 = arith.constant 9.99999974E-6 : f32
    %120 = vector.broadcast %cst_46 : f32 to vector<1x1xf32>
    %121 = arith.addf %119, %120 : vector<1x1xf32>
    %122 = math.rsqrt %121 : vector<1x1xf32>
    %123 = vector.extract_strided_slice %6 {offsets = [12, 0], sizes = [4, 1], strides = [1, 1]} : vector<16x1xf32> to vector<4x1xf32>
    %124 = vector.broadcast %122 : vector<1x1xf32> to vector<4x1xf32>
    %125 = arith.mulf %124, %123 : vector<4x1xf32>
    %126 = vector.extract_strided_slice %7 {offsets = [12, 0], sizes = [4, 1], strides = [1, 1]} : vector<16x1xf32> to vector<4x1xf32>
    %127 = vector.broadcast %115 : vector<1x1xf32> to vector<4x1xf32>
    %128 = arith.mulf %127, %125 : vector<4x1xf32>
    %129 = arith.subf %126, %128 : vector<4x1xf32>
    %130 = tpu.concatenate %47, %73, %99, %125 in 0 : vector<4x1xf32>, vector<4x1xf32>, vector<4x1xf32>, vector<4x1xf32> -> vector<16x1xf32>
    %131 = tpu.concatenate %51, %77, %103, %129 in 0 : vector<4x1xf32>, vector<4x1xf32>, vector<4x1xf32>, vector<4x1xf32> -> vector<16x1xf32>
    %132 = vector.broadcast %130 : vector<16x1xf32> to vector<16x128xf32>
    %133 = arith.mulf %25, %132 : vector<16x128xf32>
    %134 = vector.broadcast %131 : vector<16x1xf32> to vector<16x128xf32>
    %135 = arith.addf %133, %134 : vector<16x128xf32>
    %136 = arith.negf %135 : vector<16x128xf32>
    %137 = math.exp %136 : vector<16x128xf32>
    %cst_47 = arith.constant 1.000000e+00 : f32
    %138 = vector.broadcast %cst_47 : f32 to vector<16x128xf32>
    %139 = arith.addf %138, %137 : vector<16x128xf32>
    %140 = arith.divf %138, %139 : vector<16x128xf32>
    %141 = arith.mulf %135, %140 : vector<16x128xf32>
    %142 = vector.broadcast %4 : vector<1x128xf32> to vector<16x128xf32>
    %143 = arith.mulf %141, %142 : vector<16x128xf32>
    %c1_i32 = arith.constant 1 : i32
    %144 = tpu.dynamic_rotate %143 by %c1_i32 dim 1 : vector<16x128xf32>, i32 -> vector<16x128xf32>
    %c127_i32 = arith.constant 127 : i32
    %145 = tpu.dynamic_rotate %143 by %c127_i32 dim 1 : vector<16x128xf32>, i32 -> vector<16x128xf32>
    %146 = tpu.concatenate %144, %143, %145 in 0 : vector<16x128xf32>, vector<16x128xf32>, vector<16x128xf32> -> vector<48x128xf32>
    %c1 = arith.constant 1 : index
    %c0_48 = arith.constant 0 : index
    %c0_49 = arith.constant 0 : index
    %147 = vector.load %arg1[%c1, %c0_48, %c0_49] : memref<2x8x16xf32, #tpu.memory_space<vmem>>, vector<1x8x16xf32>
    %148 = vector.shape_cast %147 : vector<1x8x16xf32> to vector<8x16xf32>
    %c0_50 = arith.constant 0 : index
    %c0_51 = arith.constant 0 : index
    %149 = vector.load %arg11[%c0_50, %c0_51] : memref<16x128xf32, #tpu.memory_space<vmem>>, vector<8x16xf32>
    tpu.vector_store %arg11[%c0_50, %c0_51], %148 {strides = array<i32>} : memref<16x128xf32, #tpu.memory_space<vmem>>, vector<8x16xf32>,
    %c1_52 = arith.constant 1 : index
    %c0_53 = arith.constant 0 : index
    %c0_54 = arith.constant 0 : index
    %150 = vector.load %arg2[%c1_52, %c0_53, %c0_54] : memref<2x4x16xf32, #tpu.memory_space<vmem>>, vector<1x4x16xf32>
    %151 = vector.shape_cast %150 : vector<1x4x16xf32> to vector<4x16xf32>
    %c8_55 = arith.constant 8 : index
    %c0_56 = arith.constant 0 : index
    %152 = vector.load %arg11[%c8_55, %c0_56] : memref<16x128xf32, #tpu.memory_space<vmem>>, vector<4x16xf32>
    tpu.vector_store %arg11[%c8_55, %c0_56], %151 {strides = array<i32>} : memref<16x128xf32, #tpu.memory_space<vmem>>, vector<4x16xf32>,
    %c1_57 = arith.constant 1 : index
    %c0_58 = arith.constant 0 : index
    %c0_59 = arith.constant 0 : index
    %153 = vector.load %arg3[%c1_57, %c0_58, %c0_59] : memref<2x4x16xf32, #tpu.memory_space<vmem>>, vector<1x4x16xf32>
    %154 = vector.shape_cast %153 : vector<1x4x16xf32> to vector<4x16xf32>
    %c12_60 = arith.constant 12 : index
    %c0_61 = arith.constant 0 : index
    %155 = vector.load %arg11[%c12_60, %c0_61] : memref<16x128xf32, #tpu.memory_space<vmem>>, vector<4x16xf32>
    tpu.vector_store %arg11[%c12_60, %c0_61], %154 {strides = array<i32>} : memref<16x128xf32, #tpu.memory_space<vmem>>, vector<4x16xf32>,
    %c0_62 = arith.constant 0 : index
    %c0_63 = arith.constant 0 : index
    %156 = vector.load %arg11[%c0_62, %c0_63] : memref<16x128xf32, #tpu.memory_space<vmem>>, vector<16x128xf32>
    %157 = vector.extract_strided_slice %156 {offsets = [0, 0], sizes = [4, 128], strides = [1, 1]} : vector<16x128xf32> to vector<4x128xf32>
    %cst_64 = arith.constant dense<0.000000e+00> : vector<4xf32>
    %158 = vector.multi_reduction <add>, %157, %cst_64 [1] : vector<4x128xf32> to vector<4xf32>
    %159 = vector.shape_cast %158 : vector<4xf32> to vector<4x1xf32>
    %cst_65 = arith.constant dense<0.000000e+00> : vector<1xf32>
    %160 = vector.multi_reduction <add>, %159, %cst_65 [0] : vector<4x1xf32> to vector<1xf32>
    %161 = vector.shape_cast %160 : vector<1xf32> to vector<1x1xf32>
    %162 = arith.mulf %157, %157 : vector<4x128xf32>
    %cst_66 = arith.constant dense<0.000000e+00> : vector<4xf32>
    %163 = vector.multi_reduction <add>, %162, %cst_66 [1] : vector<4x128xf32> to vector<4xf32>
    %164 = vector.shape_cast %163 : vector<4xf32> to vector<4x1xf32>
    %cst_67 = arith.constant dense<0.000000e+00> : vector<1xf32>
    %165 = vector.multi_reduction <add>, %164, %cst_67 [0] : vector<4x1xf32> to vector<1xf32>
    %166 = vector.shape_cast %165 : vector<1xf32> to vector<1x1xf32>
    %cst_68 = arith.constant 1.562500e-02 : f32
    %167 = vector.broadcast %cst_68 : f32 to vector<1x1xf32>
    %168 = arith.mulf %161, %167 : vector<1x1xf32>
    %cst_69 = arith.constant 1.562500e-02 : f32
    %169 = vector.broadcast %cst_69 : f32 to vector<1x1xf32>
    %170 = arith.mulf %166, %169 : vector<1x1xf32>
    %171 = arith.mulf %168, %168 : vector<1x1xf32>
    %172 = arith.subf %170, %171 : vector<1x1xf32>
    %cst_70 = arith.constant 9.99999974E-6 : f32
    %173 = vector.broadcast %cst_70 : f32 to vector<1x1xf32>
    %174 = arith.addf %172, %173 : vector<1x1xf32>
    %175 = math.rsqrt %174 : vector<1x1xf32>
    %176 = vector.extract_strided_slice %6 {offsets = [0, 0], sizes = [4, 1], strides = [1, 1]} : vector<16x1xf32> to vector<4x1xf32>
    %177 = vector.broadcast %175 : vector<1x1xf32> to vector<4x1xf32>
    %178 = arith.mulf %177, %176 : vector<4x1xf32>
    %179 = vector.extract_strided_slice %7 {offsets = [0, 0], sizes = [4, 1], strides = [1, 1]} : vector<16x1xf32> to vector<4x1xf32>
    %180 = vector.broadcast %168 : vector<1x1xf32> to vector<4x1xf32>
    %181 = arith.mulf %180, %178 : vector<4x1xf32>
    %182 = arith.subf %179, %181 : vector<4x1xf32>
    %183 = vector.extract_strided_slice %156 {offsets = [4, 0], sizes = [4, 128], strides = [1, 1]} : vector<16x128xf32> to vector<4x128xf32>
    %cst_71 = arith.constant dense<0.000000e+00> : vector<4xf32>
    %184 = vector.multi_reduction <add>, %183, %cst_71 [1] : vector<4x128xf32> to vector<4xf32>
    %185 = vector.shape_cast %184 : vector<4xf32> to vector<4x1xf32>
    %cst_72 = arith.constant dense<0.000000e+00> : vector<1xf32>
    %186 = vector.multi_reduction <add>, %185, %cst_72 [0] : vector<4x1xf32> to vector<1xf32>
    %187 = vector.shape_cast %186 : vector<1xf32> to vector<1x1xf32>
    %188 = arith.mulf %183, %183 : vector<4x128xf32>
    %cst_73 = arith.constant dense<0.000000e+00> : vector<4xf32>
    %189 = vector.multi_reduction <add>, %188, %cst_73 [1] : vector<4x128xf32> to vector<4xf32>
    %190 = vector.shape_cast %189 : vector<4xf32> to vector<4x1xf32>
    %cst_74 = arith.constant dense<0.000000e+00> : vector<1xf32>
    %191 = vector.multi_reduction <add>, %190, %cst_74 [0] : vector<4x1xf32> to vector<1xf32>
    %192 = vector.shape_cast %191 : vector<1xf32> to vector<1x1xf32>
    %cst_75 = arith.constant 1.562500e-02 : f32
    %193 = vector.broadcast %cst_75 : f32 to vector<1x1xf32>
    %194 = arith.mulf %187, %193 : vector<1x1xf32>
    %cst_76 = arith.constant 1.562500e-02 : f32
    %195 = vector.broadcast %cst_76 : f32 to vector<1x1xf32>
    %196 = arith.mulf %192, %195 : vector<1x1xf32>
    %197 = arith.mulf %194, %194 : vector<1x1xf32>
    %198 = arith.subf %196, %197 : vector<1x1xf32>
    %cst_77 = arith.constant 9.99999974E-6 : f32
    %199 = vector.broadcast %cst_77 : f32 to vector<1x1xf32>
    %200 = arith.addf %198, %199 : vector<1x1xf32>
    %201 = math.rsqrt %200 : vector<1x1xf32>
    %202 = vector.extract_strided_slice %6 {offsets = [4, 0], sizes = [4, 1], strides = [1, 1]} : vector<16x1xf32> to vector<4x1xf32>
    %203 = vector.broadcast %201 : vector<1x1xf32> to vector<4x1xf32>
    %204 = arith.mulf %203, %202 : vector<4x1xf32>
    %205 = vector.extract_strided_slice %7 {offsets = [4, 0], sizes = [4, 1], strides = [1, 1]} : vector<16x1xf32> to vector<4x1xf32>
    %206 = vector.broadcast %194 : vector<1x1xf32> to vector<4x1xf32>
    %207 = arith.mulf %206, %204 : vector<4x1xf32>
    %208 = arith.subf %205, %207 : vector<4x1xf32>
    %209 = vector.extract_strided_slice %156 {offsets = [8, 0], sizes = [4, 128], strides = [1, 1]} : vector<16x128xf32> to vector<4x128xf32>
    %cst_78 = arith.constant dense<0.000000e+00> : vector<4xf32>
    %210 = vector.multi_reduction <add>, %209, %cst_78 [1] : vector<4x128xf32> to vector<4xf32>
    %211 = vector.shape_cast %210 : vector<4xf32> to vector<4x1xf32>
    %cst_79 = arith.constant dense<0.000000e+00> : vector<1xf32>
    %212 = vector.multi_reduction <add>, %211, %cst_79 [0] : vector<4x1xf32> to vector<1xf32>
    %213 = vector.shape_cast %212 : vector<1xf32> to vector<1x1xf32>
    %214 = arith.mulf %209, %209 : vector<4x128xf32>
    %cst_80 = arith.constant dense<0.000000e+00> : vector<4xf32>
    %215 = vector.multi_reduction <add>, %214, %cst_80 [1] : vector<4x128xf32> to vector<4xf32>
    %216 = vector.shape_cast %215 : vector<4xf32> to vector<4x1xf32>
    %cst_81 = arith.constant dense<0.000000e+00> : vector<1xf32>
    %217 = vector.multi_reduction <add>, %216, %cst_81 [0] : vector<4x1xf32> to vector<1xf32>
    %218 = vector.shape_cast %217 : vector<1xf32> to vector<1x1xf32>
    %cst_82 = arith.constant 1.562500e-02 : f32
    %219 = vector.broadcast %cst_82 : f32 to vector<1x1xf32>
    %220 = arith.mulf %213, %219 : vector<1x1xf32>
    %cst_83 = arith.constant 1.562500e-02 : f32
    %221 = vector.broadcast %cst_83 : f32 to vector<1x1xf32>
    %222 = arith.mulf %218, %221 : vector<1x1xf32>
    %223 = arith.mulf %220, %220 : vector<1x1xf32>
    %224 = arith.subf %222, %223 : vector<1x1xf32>
    %cst_84 = arith.constant 9.99999974E-6 : f32
    %225 = vector.broadcast %cst_84 : f32 to vector<1x1xf32>
    %226 = arith.addf %224, %225 : vector<1x1xf32>
    %227 = math.rsqrt %226 : vector<1x1xf32>
    %228 = vector.extract_strided_slice %6 {offsets = [8, 0], sizes = [4, 1], strides = [1, 1]} : vector<16x1xf32> to vector<4x1xf32>
    %229 = vector.broadcast %227 : vector<1x1xf32> to vector<4x1xf32>
    %230 = arith.mulf %229, %228 : vector<4x1xf32>
    %231 = vector.extract_strided_slice %7 {offsets = [8, 0], sizes = [4, 1], strides = [1, 1]} : vector<16x1xf32> to vector<4x1xf32>
    %232 = vector.broadcast %220 : vector<1x1xf32> to vector<4x1xf32>
    %233 = arith.mulf %232, %230 : vector<4x1xf32>
    %234 = arith.subf %231, %233 : vector<4x1xf32>
    %235 = vector.extract_strided_slice %156 {offsets = [12, 0], sizes = [4, 128], strides = [1, 1]} : vector<16x128xf32> to vector<4x128xf32>
    %cst_85 = arith.constant dense<0.000000e+00> : vector<4xf32>
    %236 = vector.multi_reduction <add>, %235, %cst_85 [1] : vector<4x128xf32> to vector<4xf32>
    %237 = vector.shape_cast %236 : vector<4xf32> to vector<4x1xf32>
    %cst_86 = arith.constant dense<0.000000e+00> : vector<1xf32>
    %238 = vector.multi_reduction <add>, %237, %cst_86 [0] : vector<4x1xf32> to vector<1xf32>
    %239 = vector.shape_cast %238 : vector<1xf32> to vector<1x1xf32>
    %240 = arith.mulf %235, %235 : vector<4x128xf32>
    %cst_87 = arith.constant dense<0.000000e+00> : vector<4xf32>
    %241 = vector.multi_reduction <add>, %240, %cst_87 [1] : vector<4x128xf32> to vector<4xf32>
    %242 = vector.shape_cast %241 : vector<4xf32> to vector<4x1xf32>
    %cst_88 = arith.constant dense<0.000000e+00> : vector<1xf32>
    %243 = vector.multi_reduction <add>, %242, %cst_88 [0] : vector<4x1xf32> to vector<1xf32>
    %244 = vector.shape_cast %243 : vector<1xf32> to vector<1x1xf32>
    %cst_89 = arith.constant 1.562500e-02 : f32
    %245 = vector.broadcast %cst_89 : f32 to vector<1x1xf32>
    %246 = arith.mulf %239, %245 : vector<1x1xf32>
    %cst_90 = arith.constant 1.562500e-02 : f32
    %247 = vector.broadcast %cst_90 : f32 to vector<1x1xf32>
    %248 = arith.mulf %244, %247 : vector<1x1xf32>
    %249 = arith.mulf %246, %246 : vector<1x1xf32>
    %250 = arith.subf %248, %249 : vector<1x1xf32>
    %cst_91 = arith.constant 9.99999974E-6 : f32
    %251 = vector.broadcast %cst_91 : f32 to vector<1x1xf32>
    %252 = arith.addf %250, %251 : vector<1x1xf32>
    %253 = math.rsqrt %252 : vector<1x1xf32>
    %254 = vector.extract_strided_slice %6 {offsets = [12, 0], sizes = [4, 1], strides = [1, 1]} : vector<16x1xf32> to vector<4x1xf32>
    %255 = vector.broadcast %253 : vector<1x1xf32> to vector<4x1xf32>
    %256 = arith.mulf %255, %254 : vector<4x1xf32>
    %257 = vector.extract_strided_slice %7 {offsets = [12, 0], sizes = [4, 1], strides = [1, 1]} : vector<16x1xf32> to vector<4x1xf32>
    %258 = vector.broadcast %246 : vector<1x1xf32> to vector<4x1xf32>
    %259 = arith.mulf %258, %256 : vector<4x1xf32>
    %260 = arith.subf %257, %259 : vector<4x1xf32>
    %261 = tpu.concatenate %178, %204, %230, %256 in 0 : vector<4x1xf32>, vector<4x1xf32>, vector<4x1xf32>, vector<4x1xf32> -> vector<16x1xf32>
    %262 = tpu.concatenate %182, %208, %234, %260 in 0 : vector<4x1xf32>, vector<4x1xf32>, vector<4x1xf32>, vector<4x1xf32> -> vector<16x1xf32>
    %263 = vector.broadcast %261 : vector<16x1xf32> to vector<16x128xf32>
    %264 = arith.mulf %156, %263 : vector<16x128xf32>
    %265 = vector.broadcast %262 : vector<16x1xf32> to vector<16x128xf32>
    %266 = arith.addf %264, %265 : vector<16x128xf32>
    %267 = arith.negf %266 : vector<16x128xf32>
    %268 = math.exp %267 : vector<16x128xf32>
    %cst_92 = arith.constant 1.000000e+00 : f32
    %269 = vector.broadcast %cst_92 : f32 to vector<16x128xf32>
    %270 = arith.addf %269, %268 : vector<16x128xf32>
    %271 = arith.divf %269, %270 : vector<16x128xf32>
    %272 = arith.mulf %266, %271 : vector<16x128xf32>
    %273 = vector.broadcast %4 : vector<1x128xf32> to vector<16x128xf32>
    %274 = arith.mulf %272, %273 : vector<16x128xf32>
    %c1_i32_93 = arith.constant 1 : i32
    %275 = tpu.dynamic_rotate %274 by %c1_i32_93 dim 1 : vector<16x128xf32>, i32 -> vector<16x128xf32>
    %c127_i32_94 = arith.constant 127 : i32
    %276 = tpu.dynamic_rotate %274 by %c127_i32_94 dim 1 : vector<16x128xf32>, i32 -> vector<16x128xf32>
    %277 = tpu.concatenate %275, %274, %276 in 0 : vector<16x128xf32>, vector<16x128xf32>, vector<16x128xf32> -> vector<48x128xf32>
    %278 = tpu.concatenate %146, %277 in 1 : vector<48x128xf32>, vector<48x128xf32> -> vector<48x256xf32>
    %279 = arith.truncf %278 : vector<48x256xf32> to vector<48x256xbf16>
    %c0_95 = arith.constant 0 : index
    %c0_96 = arith.constant 0 : index
    %280 = vector.load %arg7[%c0_95, %c0_96] : memref<8x48xbf16, #tpu.memory_space<vmem>>, vector<8x48xbf16>
    %cst_97 = arith.constant dense<0.000000e+00> : vector<8x256xf32>
    %281 = tpu.matmul %280, %279, %cst_97 {dimension_numbers = #tpu.dot_dimension_numbers<[1], [0], [0], [1], [0, 0, 1, 1], [], []>} : vector<8x48xbf16>, vector<48x256xbf16>, vector<8x256xf32> -> vector<8x256xf32>
    %282 = vector.broadcast %9 : vector<8x1xf32> to vector<8x256xf32>
    %283 = arith.addf %281, %282 : vector<8x256xf32>
    %c0_98 = arith.constant 0 : index
    %c0_99 = arith.constant 0 : index
    %c0_100 = arith.constant 0 : index
    %284 = vector.load %arg4[%c0_98, %c0_99, %c0_100] : memref<2x8x2xf32, #tpu.memory_space<vmem>>, vector<1x8x2xf32>
    %285 = vector.shape_cast %284 : vector<1x8x2xf32> to vector<8x2xf32>
    %286 = vector.extract_strided_slice %283 {offsets = [0, 0], sizes = [8, 128], strides = [1, 1]} : vector<8x256xf32> to vector<8x128xf32>
    %287 = vector.extract_strided_slice %285 {offsets = [0, 0], sizes = [8, 1], strides = [1, 1]} : vector<8x2xf32> to vector<8x1xf32>
    %288 = vector.broadcast %287 : vector<8x1xf32> to vector<8x128xf32>
    %289 = arith.mulf %286, %288 : vector<8x128xf32>
    %290 = vector.extract_strided_slice %285 {offsets = [0, 1], sizes = [8, 1], strides = [1, 1]} : vector<8x2xf32> to vector<8x1xf32>
    %291 = vector.broadcast %290 : vector<8x1xf32> to vector<8x128xf32>
    %292 = arith.addf %289, %291 : vector<8x128xf32>
    %293 = vector.broadcast %4 : vector<1x128xf32> to vector<8x128xf32>
    %294 = arith.mulf %292, %293 : vector<8x128xf32>
    %295 = vector.extract_strided_slice %294 {offsets = [0, 0], sizes = [4, 128], strides = [1, 1]} : vector<8x128xf32> to vector<4x128xf32>
    %cst_101 = arith.constant dense<0.000000e+00> : vector<4xf32>
    %296 = vector.multi_reduction <add>, %295, %cst_101 [1] : vector<4x128xf32> to vector<4xf32>
    %297 = vector.shape_cast %296 : vector<4xf32> to vector<4x1xf32>
    %cst_102 = arith.constant dense<0.000000e+00> : vector<1xf32>
    %298 = vector.multi_reduction <add>, %297, %cst_102 [0] : vector<4x1xf32> to vector<1xf32>
    %299 = vector.shape_cast %298 : vector<1xf32> to vector<1x1xf32>
    %300 = arith.mulf %295, %295 : vector<4x128xf32>
    %cst_103 = arith.constant dense<0.000000e+00> : vector<4xf32>
    %301 = vector.multi_reduction <add>, %300, %cst_103 [1] : vector<4x128xf32> to vector<4xf32>
    %302 = vector.shape_cast %301 : vector<4xf32> to vector<4x1xf32>
    %cst_104 = arith.constant dense<0.000000e+00> : vector<1xf32>
    %303 = vector.multi_reduction <add>, %302, %cst_104 [0] : vector<4x1xf32> to vector<1xf32>
    %304 = vector.shape_cast %303 : vector<1xf32> to vector<1x1xf32>
    %cst_105 = arith.constant 1.562500e-02 : f32
    %305 = vector.broadcast %cst_105 : f32 to vector<1x1xf32>
    %306 = arith.mulf %299, %305 : vector<1x1xf32>
    %cst_106 = arith.constant 1.562500e-02 : f32
    %307 = vector.broadcast %cst_106 : f32 to vector<1x1xf32>
    %308 = arith.mulf %304, %307 : vector<1x1xf32>
    %309 = arith.mulf %306, %306 : vector<1x1xf32>
    %310 = arith.subf %308, %309 : vector<1x1xf32>
    %cst_107 = arith.constant 9.99999974E-6 : f32
    %311 = vector.broadcast %cst_107 : f32 to vector<1x1xf32>
    %312 = arith.addf %310, %311 : vector<1x1xf32>
    %313 = math.rsqrt %312 : vector<1x1xf32>
    %314 = vector.extract_strided_slice %10 {offsets = [0, 0], sizes = [4, 1], strides = [1, 1]} : vector<8x1xf32> to vector<4x1xf32>
    %315 = vector.broadcast %313 : vector<1x1xf32> to vector<4x1xf32>
    %316 = arith.mulf %315, %314 : vector<4x1xf32>
    %317 = vector.extract_strided_slice %11 {offsets = [0, 0], sizes = [4, 1], strides = [1, 1]} : vector<8x1xf32> to vector<4x1xf32>
    %318 = vector.broadcast %306 : vector<1x1xf32> to vector<4x1xf32>
    %319 = arith.mulf %318, %316 : vector<4x1xf32>
    %320 = arith.subf %317, %319 : vector<4x1xf32>
    %321 = vector.extract_strided_slice %294 {offsets = [4, 0], sizes = [4, 128], strides = [1, 1]} : vector<8x128xf32> to vector<4x128xf32>
    %cst_108 = arith.constant dense<0.000000e+00> : vector<4xf32>
    %322 = vector.multi_reduction <add>, %321, %cst_108 [1] : vector<4x128xf32> to vector<4xf32>
    %323 = vector.shape_cast %322 : vector<4xf32> to vector<4x1xf32>
    %cst_109 = arith.constant dense<0.000000e+00> : vector<1xf32>
    %324 = vector.multi_reduction <add>, %323, %cst_109 [0] : vector<4x1xf32> to vector<1xf32>
    %325 = vector.shape_cast %324 : vector<1xf32> to vector<1x1xf32>
    %326 = arith.mulf %321, %321 : vector<4x128xf32>
    %cst_110 = arith.constant dense<0.000000e+00> : vector<4xf32>
    %327 = vector.multi_reduction <add>, %326, %cst_110 [1] : vector<4x128xf32> to vector<4xf32>
    %328 = vector.shape_cast %327 : vector<4xf32> to vector<4x1xf32>
    %cst_111 = arith.constant dense<0.000000e+00> : vector<1xf32>
    %329 = vector.multi_reduction <add>, %328, %cst_111 [0] : vector<4x1xf32> to vector<1xf32>
    %330 = vector.shape_cast %329 : vector<1xf32> to vector<1x1xf32>
    %cst_112 = arith.constant 1.562500e-02 : f32
    %331 = vector.broadcast %cst_112 : f32 to vector<1x1xf32>
    %332 = arith.mulf %325, %331 : vector<1x1xf32>
    %cst_113 = arith.constant 1.562500e-02 : f32
    %333 = vector.broadcast %cst_113 : f32 to vector<1x1xf32>
    %334 = arith.mulf %330, %333 : vector<1x1xf32>
    %335 = arith.mulf %332, %332 : vector<1x1xf32>
    %336 = arith.subf %334, %335 : vector<1x1xf32>
    %cst_114 = arith.constant 9.99999974E-6 : f32
    %337 = vector.broadcast %cst_114 : f32 to vector<1x1xf32>
    %338 = arith.addf %336, %337 : vector<1x1xf32>
    %339 = math.rsqrt %338 : vector<1x1xf32>
    %340 = vector.extract_strided_slice %10 {offsets = [4, 0], sizes = [4, 1], strides = [1, 1]} : vector<8x1xf32> to vector<4x1xf32>
    %341 = vector.broadcast %339 : vector<1x1xf32> to vector<4x1xf32>
    %342 = arith.mulf %341, %340 : vector<4x1xf32>
    %343 = vector.extract_strided_slice %11 {offsets = [4, 0], sizes = [4, 1], strides = [1, 1]} : vector<8x1xf32> to vector<4x1xf32>
    %344 = vector.broadcast %332 : vector<1x1xf32> to vector<4x1xf32>
    %345 = arith.mulf %344, %342 : vector<4x1xf32>
    %346 = arith.subf %343, %345 : vector<4x1xf32>
    %347 = tpu.concatenate %316, %342 in 0 : vector<4x1xf32>, vector<4x1xf32> -> vector<8x1xf32>
    %348 = tpu.concatenate %320, %346 in 0 : vector<4x1xf32>, vector<4x1xf32> -> vector<8x1xf32>
    %349 = vector.broadcast %347 : vector<8x1xf32> to vector<8x128xf32>
    %350 = arith.mulf %294, %349 : vector<8x128xf32>
    %351 = vector.broadcast %348 : vector<8x1xf32> to vector<8x128xf32>
    %352 = arith.addf %350, %351 : vector<8x128xf32>
    %353 = arith.negf %352 : vector<8x128xf32>
    %354 = math.exp %353 : vector<8x128xf32>
    %cst_115 = arith.constant 1.000000e+00 : f32
    %355 = vector.broadcast %cst_115 : f32 to vector<8x128xf32>
    %356 = arith.addf %355, %354 : vector<8x128xf32>
    %357 = arith.divf %355, %356 : vector<8x128xf32>
    %358 = arith.mulf %352, %357 : vector<8x128xf32>
    %359 = vector.broadcast %4 : vector<1x128xf32> to vector<8x128xf32>
    %360 = arith.mulf %358, %359 : vector<8x128xf32>
    %c1_i32_116 = arith.constant 1 : i32
    %361 = tpu.dynamic_rotate %360 by %c1_i32_116 dim 1 : vector<8x128xf32>, i32 -> vector<8x128xf32>
    %c127_i32_117 = arith.constant 127 : i32
    %362 = tpu.dynamic_rotate %360 by %c127_i32_117 dim 1 : vector<8x128xf32>, i32 -> vector<8x128xf32>
    %363 = tpu.concatenate %361, %360, %362 in 0 : vector<8x128xf32>, vector<8x128xf32>, vector<8x128xf32> -> vector<24x128xf32>
    %c1_118 = arith.constant 1 : index
    %c0_119 = arith.constant 0 : index
    %c0_120 = arith.constant 0 : index
    %364 = vector.load %arg4[%c1_118, %c0_119, %c0_120] : memref<2x8x2xf32, #tpu.memory_space<vmem>>, vector<1x8x2xf32>
    %365 = vector.shape_cast %364 : vector<1x8x2xf32> to vector<8x2xf32>
    %366 = vector.extract_strided_slice %283 {offsets = [0, 128], sizes = [8, 128], strides = [1, 1]} : vector<8x256xf32> to vector<8x128xf32>
    %367 = vector.extract_strided_slice %365 {offsets = [0, 0], sizes = [8, 1], strides = [1, 1]} : vector<8x2xf32> to vector<8x1xf32>
    %368 = vector.broadcast %367 : vector<8x1xf32> to vector<8x128xf32>
    %369 = arith.mulf %366, %368 : vector<8x128xf32>
    %370 = vector.extract_strided_slice %365 {offsets = [0, 1], sizes = [8, 1], strides = [1, 1]} : vector<8x2xf32> to vector<8x1xf32>
    %371 = vector.broadcast %370 : vector<8x1xf32> to vector<8x128xf32>
    %372 = arith.addf %369, %371 : vector<8x128xf32>
    %373 = vector.broadcast %4 : vector<1x128xf32> to vector<8x128xf32>
    %374 = arith.mulf %372, %373 : vector<8x128xf32>
    %375 = vector.extract_strided_slice %374 {offsets = [0, 0], sizes = [4, 128], strides = [1, 1]} : vector<8x128xf32> to vector<4x128xf32>
    %cst_121 = arith.constant dense<0.000000e+00> : vector<4xf32>
    %376 = vector.multi_reduction <add>, %375, %cst_121 [1] : vector<4x128xf32> to vector<4xf32>
    %377 = vector.shape_cast %376 : vector<4xf32> to vector<4x1xf32>
    %cst_122 = arith.constant dense<0.000000e+00> : vector<1xf32>
    %378 = vector.multi_reduction <add>, %377, %cst_122 [0] : vector<4x1xf32> to vector<1xf32>
    %379 = vector.shape_cast %378 : vector<1xf32> to vector<1x1xf32>
    %380 = arith.mulf %375, %375 : vector<4x128xf32>
    %cst_123 = arith.constant dense<0.000000e+00> : vector<4xf32>
    %381 = vector.multi_reduction <add>, %380, %cst_123 [1] : vector<4x128xf32> to vector<4xf32>
    %382 = vector.shape_cast %381 : vector<4xf32> to vector<4x1xf32>
    %cst_124 = arith.constant dense<0.000000e+00> : vector<1xf32>
    %383 = vector.multi_reduction <add>, %382, %cst_124 [0] : vector<4x1xf32> to vector<1xf32>
    %384 = vector.shape_cast %383 : vector<1xf32> to vector<1x1xf32>
    %cst_125 = arith.constant 1.562500e-02 : f32
    %385 = vector.broadcast %cst_125 : f32 to vector<1x1xf32>
    %386 = arith.mulf %379, %385 : vector<1x1xf32>
    %cst_126 = arith.constant 1.562500e-02 : f32
    %387 = vector.broadcast %cst_126 : f32 to vector<1x1xf32>
    %388 = arith.mulf %384, %387 : vector<1x1xf32>
    %389 = arith.mulf %386, %386 : vector<1x1xf32>
    %390 = arith.subf %388, %389 : vector<1x1xf32>
    %cst_127 = arith.constant 9.99999974E-6 : f32
    %391 = vector.broadcast %cst_127 : f32 to vector<1x1xf32>
    %392 = arith.addf %390, %391 : vector<1x1xf32>
    %393 = math.rsqrt %392 : vector<1x1xf32>
    %394 = vector.extract_strided_slice %10 {offsets = [0, 0], sizes = [4, 1], strides = [1, 1]} : vector<8x1xf32> to vector<4x1xf32>
    %395 = vector.broadcast %393 : vector<1x1xf32> to vector<4x1xf32>
    %396 = arith.mulf %395, %394 : vector<4x1xf32>
    %397 = vector.extract_strided_slice %11 {offsets = [0, 0], sizes = [4, 1], strides = [1, 1]} : vector<8x1xf32> to vector<4x1xf32>
    %398 = vector.broadcast %386 : vector<1x1xf32> to vector<4x1xf32>
    %399 = arith.mulf %398, %396 : vector<4x1xf32>
    %400 = arith.subf %397, %399 : vector<4x1xf32>
    %401 = vector.extract_strided_slice %374 {offsets = [4, 0], sizes = [4, 128], strides = [1, 1]} : vector<8x128xf32> to vector<4x128xf32>
    %cst_128 = arith.constant dense<0.000000e+00> : vector<4xf32>
    %402 = vector.multi_reduction <add>, %401, %cst_128 [1] : vector<4x128xf32> to vector<4xf32>
    %403 = vector.shape_cast %402 : vector<4xf32> to vector<4x1xf32>
    %cst_129 = arith.constant dense<0.000000e+00> : vector<1xf32>
    %404 = vector.multi_reduction <add>, %403, %cst_129 [0] : vector<4x1xf32> to vector<1xf32>
    %405 = vector.shape_cast %404 : vector<1xf32> to vector<1x1xf32>
    %406 = arith.mulf %401, %401 : vector<4x128xf32>
    %cst_130 = arith.constant dense<0.000000e+00> : vector<4xf32>
    %407 = vector.multi_reduction <add>, %406, %cst_130 [1] : vector<4x128xf32> to vector<4xf32>
    %408 = vector.shape_cast %407 : vector<4xf32> to vector<4x1xf32>
    %cst_131 = arith.constant dense<0.000000e+00> : vector<1xf32>
    %409 = vector.multi_reduction <add>, %408, %cst_131 [0] : vector<4x1xf32> to vector<1xf32>
    %410 = vector.shape_cast %409 : vector<1xf32> to vector<1x1xf32>
    %cst_132 = arith.constant 1.562500e-02 : f32
    %411 = vector.broadcast %cst_132 : f32 to vector<1x1xf32>
    %412 = arith.mulf %405, %411 : vector<1x1xf32>
    %cst_133 = arith.constant 1.562500e-02 : f32
    %413 = vector.broadcast %cst_133 : f32 to vector<1x1xf32>
    %414 = arith.mulf %410, %413 : vector<1x1xf32>
    %415 = arith.mulf %412, %412 : vector<1x1xf32>
    %416 = arith.subf %414, %415 : vector<1x1xf32>
    %cst_134 = arith.constant 9.99999974E-6 : f32
    %417 = vector.broadcast %cst_134 : f32 to vector<1x1xf32>
    %418 = arith.addf %416, %417 : vector<1x1xf32>
    %419 = math.rsqrt %418 : vector<1x1xf32>
    %420 = vector.extract_strided_slice %10 {offsets = [4, 0], sizes = [4, 1], strides = [1, 1]} : vector<8x1xf32> to vector<4x1xf32>
    %421 = vector.broadcast %419 : vector<1x1xf32> to vector<4x1xf32>
    %422 = arith.mulf %421, %420 : vector<4x1xf32>
    %423 = vector.extract_strided_slice %11 {offsets = [4, 0], sizes = [4, 1], strides = [1, 1]} : vector<8x1xf32> to vector<4x1xf32>
    %424 = vector.broadcast %412 : vector<1x1xf32> to vector<4x1xf32>
    %425 = arith.mulf %424, %422 : vector<4x1xf32>
    %426 = arith.subf %423, %425 : vector<4x1xf32>
    %427 = tpu.concatenate %396, %422 in 0 : vector<4x1xf32>, vector<4x1xf32> -> vector<8x1xf32>
    %428 = tpu.concatenate %400, %426 in 0 : vector<4x1xf32>, vector<4x1xf32> -> vector<8x1xf32>
    %429 = vector.broadcast %427 : vector<8x1xf32> to vector<8x128xf32>
    %430 = arith.mulf %374, %429 : vector<8x128xf32>
    %431 = vector.broadcast %428 : vector<8x1xf32> to vector<8x128xf32>
    %432 = arith.addf %430, %431 : vector<8x128xf32>
    %433 = arith.negf %432 : vector<8x128xf32>
    %434 = math.exp %433 : vector<8x128xf32>
    %cst_135 = arith.constant 1.000000e+00 : f32
    %435 = vector.broadcast %cst_135 : f32 to vector<8x128xf32>
    %436 = arith.addf %435, %434 : vector<8x128xf32>
    %437 = arith.divf %435, %436 : vector<8x128xf32>
    %438 = arith.mulf %432, %437 : vector<8x128xf32>
    %439 = vector.broadcast %4 : vector<1x128xf32> to vector<8x128xf32>
    %440 = arith.mulf %438, %439 : vector<8x128xf32>
    %c1_i32_136 = arith.constant 1 : i32
    %441 = tpu.dynamic_rotate %440 by %c1_i32_136 dim 1 : vector<8x128xf32>, i32 -> vector<8x128xf32>
    %c127_i32_137 = arith.constant 127 : i32
    %442 = tpu.dynamic_rotate %440 by %c127_i32_137 dim 1 : vector<8x128xf32>, i32 -> vector<8x128xf32>
    %443 = tpu.concatenate %441, %440, %442 in 0 : vector<8x128xf32>, vector<8x128xf32>, vector<8x128xf32> -> vector<24x128xf32>
    %444 = tpu.concatenate %363, %443 in 1 : vector<24x128xf32>, vector<24x128xf32> -> vector<24x256xf32>
    %445 = arith.truncf %444 : vector<24x256xf32> to vector<24x256xbf16>
    %c0_138 = arith.constant 0 : index
    %c0_139 = arith.constant 0 : index
    %446 = vector.load %arg8[%c0_138, %c0_139] : memref<8x24xbf16, #tpu.memory_space<vmem>>, vector<8x24xbf16>
    %cst_140 = arith.constant dense<0.000000e+00> : vector<8x256xf32>
    %447 = tpu.matmul %446, %445, %cst_140 {dimension_numbers = #tpu.dot_dimension_numbers<[1], [0], [0], [1], [0, 0, 1, 1], [], []>} : vector<8x24xbf16>, vector<24x256xbf16>, vector<8x256xf32> -> vector<8x256xf32>
    %448 = vector.broadcast %12 : vector<8x1xf32> to vector<8x256xf32>
    %449 = arith.addf %447, %448 : vector<8x256xf32>
    %450 = vector.extract_strided_slice %449 {offsets = [0, 0], sizes = [8, 16], strides = [1, 1]} : vector<8x256xf32> to vector<8x16xf32>
    %c0_141 = arith.constant 0 : index
    %c0_142 = arith.constant 0 : index
    %451 = vector.load %arg9[%c0_141, %c0_142] : memref<8x8xbf16, #tpu.memory_space<vmem>>, vector<8x8xbf16>
    %c0_143 = arith.constant 0 : index
    %c0_144 = arith.constant 0 : index
    %c0_145 = arith.constant 0 : index
    %452 = vector.load %arg1[%c0_143, %c0_144, %c0_145] : memref<2x8x16xf32, #tpu.memory_space<vmem>>, vector<1x8x16xf32>
    %453 = vector.shape_cast %452 : vector<1x8x16xf32> to vector<8x16xf32>
    %454 = arith.truncf %453 : vector<8x16xf32> to vector<8x16xbf16>
    %cst_146 = arith.constant dense<0.000000e+00> : vector<8x16xf32>
    %455 = tpu.matmul %451, %454, %cst_146 {dimension_numbers = #tpu.dot_dimension_numbers<[1], [0], [0], [1], [0, 0, 1, 1], [], []>} : vector<8x8xbf16>, vector<8x16xbf16>, vector<8x16xf32> -> vector<8x16xf32>
    %456 = arith.addf %450, %455 : vector<8x16xf32>
    %457 = vector.broadcast %13 : vector<8x1xf32> to vector<8x16xf32>
    %458 = arith.addf %456, %457 : vector<8x16xf32>
    %c0_147 = arith.constant 0 : index
    %c0_148 = arith.constant 0 : index
    %c0_149 = arith.constant 0 : index
    %459 = vector.load %arg10[%c0_147, %c0_148, %c0_149] : memref<2x8x16xf32, #tpu.memory_space<vmem>>, vector<1x8x16xf32>
    %460 = vector.shape_cast %459 : vector<1x8x16xf32> to vector<8x16xf32>
    %461 = vector.shape_cast %458 : vector<8x16xf32> to vector<1x8x16xf32>
    tpu.vector_store %arg10[%c0_147, %c0_148, %c0_149], %461 {strides = array<i32>} : memref<2x8x16xf32, #tpu.memory_space<vmem>>, vector<1x8x16xf32>,
    %462 = vector.extract_strided_slice %449 {offsets = [0, 128], sizes = [8, 16], strides = [1, 1]} : vector<8x256xf32> to vector<8x16xf32>
    %c0_150 = arith.constant 0 : index
    %c0_151 = arith.constant 0 : index
    %463 = vector.load %arg9[%c0_150, %c0_151] : memref<8x8xbf16, #tpu.memory_space<vmem>>, vector<8x8xbf16>
    %c1_152 = arith.constant 1 : index
    %c0_153 = arith.constant 0 : index
    %c0_154 = arith.constant 0 : index
    %464 = vector.load %arg1[%c1_152, %c0_153, %c0_154] : memref<2x8x16xf32, #tpu.memory_space<vmem>>, vector<1x8x16xf32>
    %465 = vector.shape_cast %464 : vector<1x8x16xf32> to vector<8x16xf32>
    %466 = arith.truncf %465 : vector<8x16xf32> to vector<8x16xbf16>
    %cst_155 = arith.constant dense<0.000000e+00> : vector<8x16xf32>
    %467 = tpu.matmul %463, %466, %cst_155 {dimension_numbers = #tpu.dot_dimension_numbers<[1], [0], [0], [1], [0, 0, 1, 1], [], []>} : vector<8x8xbf16>, vector<8x16xbf16>, vector<8x16xf32> -> vector<8x16xf32>
    %468 = arith.addf %462, %467 : vector<8x16xf32>
    %469 = vector.broadcast %13 : vector<8x1xf32> to vector<8x16xf32>
    %470 = arith.addf %468, %469 : vector<8x16xf32>
    %c1_156 = arith.constant 1 : index
    %c0_157 = arith.constant 0 : index
    %c0_158 = arith.constant 0 : index
    %471 = vector.load %arg10[%c1_156, %c0_157, %c0_158] : memref<2x8x16xf32, #tpu.memory_space<vmem>>, vector<1x8x16xf32>
    %472 = vector.shape_cast %471 : vector<1x8x16xf32> to vector<8x16xf32>
    %473 = vector.shape_cast %470 : vector<8x16xf32> to vector<1x8x16xf32>
    tpu.vector_store %arg10[%c1_156, %c0_157, %c0_158], %473 {strides = array<i32>} : memref<2x8x16xf32, #tpu.memory_space<vmem>>, vector<1x8x16xf32>,
    return
  }
  func.func @transform_0(%arg0: i32) -> (i32, i32, i32) {
    %c0_i32 = arith.constant 0 : i32
    %c0_i32_0 = arith.constant 0 : i32
    %c0_i32_1 = arith.constant 0 : i32
    return %arg0, %c0_i32, %c0_i32_0 : i32, i32, i32
  }
  func.func @transform_1(%arg0: i32) -> (i32, i32, i32) {
    %c0_i32 = arith.constant 0 : i32
    %c0_i32_0 = arith.constant 0 : i32
    %c0_i32_1 = arith.constant 0 : i32
    return %arg0, %c0_i32, %c0_i32_0 : i32, i32, i32
  }
  func.func @transform_2(%arg0: i32) -> (i32, i32, i32) {
    %c0_i32 = arith.constant 0 : i32
    %c0_i32_0 = arith.constant 0 : i32
    %c0_i32_1 = arith.constant 0 : i32
    return %arg0, %c0_i32, %c0_i32_0 : i32, i32, i32
  }
  func.func @transform_3(%arg0: i32) -> (i32, i32, i32) {
    %c0_i32 = arith.constant 0 : i32
    %c0_i32_0 = arith.constant 0 : i32
    %c0_i32_1 = arith.constant 0 : i32
    return %arg0, %c0_i32, %c0_i32_0 : i32, i32, i32
  }
  func.func @transform_4(%arg0: i32) -> (i32, i32) {
    %c0_i32 = arith.constant 0 : i32
    %c0_i32_0 = arith.constant 0 : i32
    %c0_i32_1 = arith.constant 0 : i32
    return %c0_i32, %c0_i32_0 : i32, i32
  }
  func.func @transform_5(%arg0: i32) -> (i32, i32) {
    %c0_i32 = arith.constant 0 : i32
    %c0_i32_0 = arith.constant 0 : i32
    %c0_i32_1 = arith.constant 0 : i32
    return %c0_i32, %c0_i32_0 : i32, i32
  }
  func.func @transform_6(%arg0: i32) -> (i32, i32) {
    %c0_i32 = arith.constant 0 : i32
    %c0_i32_0 = arith.constant 0 : i32
    %c0_i32_1 = arith.constant 0 : i32
    return %c0_i32, %c0_i32_0 : i32, i32
  }
  func.func @transform_7(%arg0: i32) -> (i32, i32) {
    %c0_i32 = arith.constant 0 : i32
    %c0_i32_0 = arith.constant 0 : i32
    %c0_i32_1 = arith.constant 0 : i32
    return %c0_i32, %c0_i32_0 : i32, i32
  }
  func.func @transform_8(%arg0: i32) -> (i32, i32) {
    %c0_i32 = arith.constant 0 : i32
    %c0_i32_0 = arith.constant 0 : i32
    %c0_i32_1 = arith.constant 0 : i32
    return %c0_i32, %c0_i32_0 : i32, i32
  }
  func.func @transform_9(%arg0: i32) -> (i32, i32, i32) {
    %c0_i32 = arith.constant 0 : i32
    %c0_i32_0 = arith.constant 0 : i32
    %c0_i32_1 = arith.constant 0 : i32
    return %arg0, %c0_i32, %c0_i32_0 : i32, i32, i32
  }
}

</mosaic_0001>

<llo_original>
// kernel: _lambda_.1
$region0: #{_lambda_.1}
  #allocation0 [shape = 'u32[]', space=smem, size = 0x4, offset = 0x4, fixed_abs, tag = 'smem constant byte address 0x4 - core index']
  #allocation1 [shape = 'u32[144,128]{1,0:T(1,128)}', space=vmem, size = 0x12000, scoped, tag = 'internal scratch']
  #allocation2 [shape = 'f32[16,128]{1,0:T(8,128)}', space=vmem, size = 0x2000, scoped, tag = 'scratch operand']
  %s0 = inlined_call_operand.vmem [shape: f32[2,8,16], index: 0, kind: input, shape index: {}]
  %s1 = inlined_call_operand.vmem [shape: f32[2,4,16], index: 1, kind: input, shape index: {}]
  %s2 = inlined_call_operand.vmem [shape: f32[2,4,16], index: 2, kind: input, shape index: {}]
  %s3 = inlined_call_operand.vmem [shape: f32[2,8,2], index: 3, kind: input, shape index: {}]
  %s4 = inlined_call_operand.vmem [shape: f32[16,2], index: 4, kind: input, shape index: {}]
  %s5 = inlined_call_operand.vmem [shape: f32[8,5], index: 5, kind: input, shape index: {}]
  %s6 = inlined_call_operand.vmem [shape: bf16[8,48], index: 6, kind: input, shape index: {}]
  %s7 = inlined_call_operand.vmem [shape: bf16[8,24], index: 7, kind: input, shape index: {}]
  %s8 = inlined_call_operand.vmem [shape: bf16[8,8], index: 8, kind: input, shape index: {}]
  %s9 = inlined_call_operand.hbm [shape: f32[2,8,16], index: 9, kind: output, shape index: {}]
  %s10 = sld [smem:[#allocation0]]
  $region46: #{_lambda_.1} parent=0
    _
  %s12 = ssub.s32 1, %s10
  %s13 = scalar_select 0, %s12, %s10
  $region1: #{_lambda_.1} parent=0
    #allocation3 [shape = 'u8[8192]{0}', space=vmem, size = 0x2000, scoped, tag = 'output window, operand 0, single buffered']
    #allocation4 [shape = 's32[1]{0}', space=sflag, size = 0x4, scoped, tag = 'scoped memory for _lambda_.1']
    %14 = vsyncpa [#allocation4], 0
    // Predicated region
    $region2: #{_lambda_.1} parent=1 // pred_check
      _
    $region3: #{_lambda_.1} parent=1 // pred_check_branch
      %16 = sbr.rel (0) target = $region5
    $region4: #{_lambda_.1} parent=1 // pred_region
      _
    $region5: #{_lambda_.1} parent=1 // pred_fallthru
      _
    // Predicated region
    $region6: #{_lambda_.1} parent=1 // pred_check
      _
    $region7: #{_lambda_.1} parent=1 // pred_check_branch
      %18 = sbr.rel (0) target = $region9
    $region8: #{_lambda_.1} parent=1 // pred_region
      _
    $region9: #{_lambda_.1} parent=1 // pred_fallthru
      _
    // Predicated region
    $region10: #{_lambda_.1} parent=1 // pred_check
      _
    $region11: #{_lambda_.1} parent=1 // pred_check_branch
      %20 = sbr.rel (0) target = $region13
    $region12: #{_lambda_.1} parent=1 // pred_region
      _
    $region13: #{_lambda_.1} parent=1 // pred_fallthru
      _
    // Predicated region
    $region14: #{_lambda_.1} parent=1 // pred_check
      _
    $region15: #{_lambda_.1} parent=1 // pred_check_branch
      %22 = sbr.rel (0) target = $region17
    $region16: #{_lambda_.1} parent=1 // pred_region
      _
    $region17: #{_lambda_.1} parent=1 // pred_fallthru
      _
    // Predicated region
    $region18: #{_lambda_.1} parent=1 // pred_check
      _
    $region19: #{_lambda_.1} parent=1 // pred_check_branch
      %24 = sbr.rel (0) target = $region21
    $region20: #{_lambda_.1} parent=1 // pred_region
      _
    $region21: #{_lambda_.1} parent=1 // pred_fallthru
      _
    // Predicated region
    $region22: #{_lambda_.1} parent=1 // pred_check
      _
    $region23: #{_lambda_.1} parent=1 // pred_check_branch
      %26 = sbr.rel (0) target = $region25
    $region24: #{_lambda_.1} parent=1 // pred_region
      _
    $region25: #{_lambda_.1} parent=1 // pred_fallthru
      _
    // Predicated region
    $region26: #{_lambda_.1} parent=1 // pred_check
      _
    $region27: #{_lambda_.1} parent=1 // pred_check_branch
      %28 = sbr.rel (0) target = $region29
    $region28: #{_lambda_.1} parent=1 // pred_region
      _
    $region29: #{_lambda_.1} parent=1 // pred_fallthru
      _
    // Predicated region
    $region30: #{_lambda_.1} parent=1 // pred_check
      _
    $region31: #{_lambda_.1} parent=1 // pred_check_branch
      %30 = sbr.rel (0) target = $region33
    $region32: #{_lambda_.1} parent=1 // pred_region
      _
    $region33: #{_lambda_.1} parent=1 // pred_fallthru
      _
    // Predicated region
    $region34: #{_lambda_.1} parent=1 // pred_check
      _
    $region35: #{_lambda_.1} parent=1 // pred_check_branch
      %32 = sbr.rel (0) target = $region37
    $region36: #{_lambda_.1} parent=1 // pred_region
      _
    $region37: #{_lambda_.1} parent=1 // pred_fallthru
      _
    %v34 = vlaneseq
    %v35 = vand.u32 %v34, 127
    %vm36 = vcmp.lt.s32.totalorder %v35, 16
    %v37 = vsel %vm36, 1, 0
    %v38 = vcvt.s32.f32 %v37
    %v39 = vld [vmem:[%s4] sm:$0xff]
    %v40 = vld [vmem:[%s4 + $0x8] sm:$0xff]
    %v41 = vld [vmem:[%s5] sm:$0xff]
    %vm42 = vcmask 1047680
    %43 = vst.msk [vmem:[#allocation2] sm:$0xff] %vm42, 0.0
    %44 = vst.msk [vmem:[#allocation2 + $0x8] sm:$0xff] %vm42, 0.0
    %v45 = vld [vmem:[%s0] sm:$0xff]
    %vm46 = vcmask 130048
    %47 = vst.msk [vmem:[#allocation2] sm:$0xff] %vm46, %v45
    %v48 = vld [vmem:[%s1] sm:$0xf]
    %vm49 = vcmask 125952
    %50 = vst.msk [vmem:[#allocation2 + $0x8] sm:$0xf] %vm49, %v48
    %v51 = vld [vmem:[%s2] sm:$0xf]
    %52 = vst.msk [vmem:[#allocation2 + $0xc] sm:$0xf] %vm49, %v51
    %v53 = vld [vmem:[#allocation2] sm:$0xff]
    %v54 = vld [vmem:[#allocation2 + $0x8] sm:$0xff]
    %vm55 = vcmask 1043456
    %v56 = vsel %vm55, %v53, 0.0
    %57 = vadd.xlane.f32.xlu0 %v56
    %v58 = vpop.xlane.xlu0 %57
    %v59 = vsel %vm55, %v58, 0.0
    %v60 = vrot.slane %v59, 4
    %v61 = vadd.f32 %v59, %v60
    %v62 = vrot.slane %v61, 2
    %v63 = vadd.f32 %v61, %v62
    %v64 = vrot.slane %v63, 1
    %v65 = vadd.f32 %v63, %v64
    %v66 = vmul.f32 %v53, %v53
    %v67 = vsel %vm55, %v66, 0.0
    %68 = vadd.xlane.f32.xlu0 %v67
    %v69 = vpop.xlane.xlu0 %68
    %v70 = vsel %vm55, %v69, 0.0
    %v71 = vrot.slane %v70, 4
    %v72 = vadd.f32 %v70, %v71
    %v73 = vrot.slane %v72, 2
    %v74 = vadd.f32 %v72, %v73
    %v75 = vrot.slane %v74, 1
    %v76 = vadd.f32 %v74, %v75
    %v77 = vmul.f32 %v65, 0.015625
    %v78 = vmul.f32 %v76, 0.015625
    %v79 = vmul.f32 %v77, %v77
    %v80 = vsub.f32 %v78, %v79
    %v81 = vadd.f32 %v80, 1e-05
    %v82 = vrsqrt.pop %v81
    %v83 = vmul.f32 %v82, %v39
    %v84 = vmul.f32 %v77, %v83
    %86 = vrot.lane.b32.xlu0 %v84, 1
    %v87 = vpop.permute.xlu0 %86
    %v89 = vsub.f32 %v39, %v87
    %vm90 = vcmask 1047556
    %v91 = vsel %vm90, %v53, 0.0
    %92 = vadd.xlane.f32.xlu0 %v91
    %v93 = vpop.xlane.xlu0 %92
    %v95 = vrot.slane %v93, 4
    %v97 = vsel %vm55, %v95, 0.0
    %v98 = vrot.slane %v97, 4
    %v99 = vadd.f32 %v97, %v98
    %v100 = vrot.slane %v99, 2
    %v101 = vadd.f32 %v99, %v100
    %v102 = vrot.slane %v101, 1
    %v103 = vadd.f32 %v101, %v102
    %v104 = vsel %vm90, %v66, 0.0
    %105 = vadd.xlane.f32.xlu0 %v104
    %v106 = vpop.xlane.xlu0 %105
    %v108 = vrot.slane %v106, 4
    %v110 = vsel %vm55, %v108, 0.0
    %v111 = vrot.slane %v110, 4
    %v112 = vadd.f32 %v110, %v111
    %v113 = vrot.slane %v112, 2
    %v114 = vadd.f32 %v112, %v113
    %v115 = vrot.slane %v114, 1
    %v116 = vadd.f32 %v114, %v115
    %v117 = vmul.f32 %v103, 0.015625
    %v118 = vmul.f32 %v116, 0.015625
    %v119 = vmul.f32 %v117, %v117
    %v120 = vsub.f32 %v118, %v119
    %v121 = vadd.f32 %v120, 1e-05
    %v122 = vrsqrt.pop %v121
    %v123 = vmul.f32 %v122, %v39
    %v124 = vmul.f32 %v117, %v123
    %126 = vrot.lane.b32.xlu0 %v124, 1
    %v127 = vpop.permute.xlu0 %126
    %v129 = vsub.f32 %v39, %v127
    %v130 = vsel %vm55, %v54, 0.0
    %131 = vadd.xlane.f32.xlu0 %v130
    %v132 = vpop.xlane.xlu0 %131
    %v133 = vsel %vm55, %v132, 0.0
    %v134 = vrot.slane %v133, 4
    %v135 = vadd.f32 %v133, %v134
    %v136 = vrot.slane %v135, 2
    %v137 = vadd.f32 %v135, %v136
    %v138 = vrot.slane %v137, 1
    %v139 = vadd.f32 %v137, %v138
    %v140 = vmul.f32 %v54, %v54
    %v141 = vsel %vm55, %v140, 0.0
    %142 = vadd.xlane.f32.xlu0 %v141
    %v143 = vpop.xlane.xlu0 %142
    %v144 = vsel %vm55, %v143, 0.0
    %v145 = vrot.slane %v144, 4
    %v146 = vadd.f32 %v144, %v145
    %v147 = vrot.slane %v146, 2
    %v148 = vadd.f32 %v146, %v147
    %v149 = vrot.slane %v148, 1
    %v150 = vadd.f32 %v148, %v149
    %v151 = vmul.f32 %v139, 0.015625
    %v152 = vmul.f32 %v150, 0.015625
    %v153 = vmul.f32 %v151, %v151
    %v154 = vsub.f32 %v152, %v153
    %v155 = vadd.f32 %v154, 1e-05
    %v156 = vrsqrt.pop %v155
    %v157 = vmul.f32 %v156, %v40
    %v158 = vmul.f32 %v151, %v157
    %160 = vrot.lane.b32.xlu0 %v158, 1
    %v161 = vpop.permute.xlu0 %160
    %v163 = vsub.f32 %v40, %v161
    %v164 = vsel %vm90, %v54, 0.0
    %165 = vadd.xlane.f32.xlu0 %v164
    %v166 = vpop.xlane.xlu0 %165
    %v168 = vrot.slane %v166, 4
    %v170 = vsel %vm55, %v168, 0.0
    %v171 = vrot.slane %v170, 4
    %v172 = vadd.f32 %v170, %v171
    %v173 = vrot.slane %v172, 2
    %v174 = vadd.f32 %v172, %v173
    %v175 = vrot.slane %v174, 1
    %v176 = vadd.f32 %v174, %v175
    %v177 = vsel %vm90, %v140, 0.0
    %178 = vadd.xlane.f32.xlu0 %v177
    %v179 = vpop.xlane.xlu0 %178
    %v181 = vrot.slane %v179, 4
    %v183 = vsel %vm55, %v181, 0.0
    %v184 = vrot.slane %v183, 4
    %v185 = vadd.f32 %v183, %v184
    %v186 = vrot.slane %v185, 2
    %v187 = vadd.f32 %v185, %v186
    %v188 = vrot.slane %v187, 1
    %v189 = vadd.f32 %v187, %v188
    %v190 = vmul.f32 %v176, 0.015625
    %v191 = vmul.f32 %v189, 0.015625
    %v192 = vmul.f32 %v190, %v190
    %v193 = vsub.f32 %v191, %v192
    %v194 = vadd.f32 %v193, 1e-05
    %v195 = vrsqrt.pop %v194
    %v196 = vmul.f32 %v195, %v40
    %v197 = vmul.f32 %v190, %v196
    %199 = vrot.lane.b32.xlu0 %v197, 1
    %v200 = vpop.permute.xlu0 %199
    %v202 = vsub.f32 %v40, %v200
    %v203 = vsel %vm55, %v83, %v123
    %v204 = vsel %vm55, %v157, %v196
    %v205 = vsel %vm55, %v89, %v129
    %v206 = vsel %vm55, %v163, %v202
    %208 = vset.pattern.permute.xlu0 0
    %209 = vperm.xlu0 %208, %v203
    %v210 = vpop.permute.xlu0 %209
    %213 = vset.pattern.permute.xlu0 0
    %214 = vperm.xlu0 %213, %v204
    %v215 = vpop.permute.xlu0 %214
    %v217 = vmul.f32 %v53, %v210
    %v218 = vmul.f32 %v54, %v215
    %220 = vset.pattern.permute.xlu0 1
    %221 = vperm.xlu0 %220, %v205
    %v222 = vpop.permute.xlu0 %221
    %225 = vset.pattern.permute.xlu0 1
    %226 = vperm.xlu0 %225, %v206
    %v227 = vpop.permute.xlu0 %226
    %v229 = vadd.f32 %v217, %v222
    %v230 = vadd.f32 %v218, %v227
    %v231 = vxor.u32 %v229, 2147483648
    %v232 = vxor.u32 %v230, 2147483648
    %v233 = vmul.f32 %v231, 1.442695
    %v234 = vpow.pop %v233
    %v235 = vmul.f32 %v232, 1.442695
    %v236 = vpow.pop %v235
    %v237 = vadd.f32 %v234, 1.0
    %v238 = vadd.f32 %v236, 1.0
    %v239 = vrcp.pop %v237
    %v240 = vmul.f32 1.0, %v239
    %v241 = vrcp.pop %v238
    %v242 = vmul.f32 1.0, %v241
    %v243 = vmul.f32 %v229, %v240
    %v244 = vmul.f32 %v230, %v242
    %v245 = vmul.f32 %v243, %v38
    %v246 = vmul.f32 %v244, %v38
    %247 = vrot.lane.b32.xlu0 %v245, 1
    %v248 = vpop.permute.xlu0 %247
    %249 = vrot.lane.b32.xlu0 %v246, 1
    %v250 = vpop.permute.xlu0 %249
    %251 = vrot.lane.b32.xlu0 %v245, 127
    %v252 = vpop.permute.xlu0 %251
    %253 = vrot.lane.b32.xlu0 %v246, 127
    %v254 = vpop.permute.xlu0 %253
    %s255 = scalar_lea.vmem %s0, 8
    %v256 = vld [vmem:[%s255] sm:$0xff]
    %257 = vst.msk [vmem:[#allocation2] sm:$0xff] %vm46, %v256
    %s258 = scalar_lea.vmem %s1, 4
    %v259 = vld [vmem:[%s258] sm:$0xf]
    %260 = vst.msk [vmem:[#allocation2 + $0x8] sm:$0xf] %vm49, %v259
    %s261 = scalar_lea.vmem %s2, 4
    %v262 = vld [vmem:[%s261] sm:$0xf]
    %263 = vst.msk [vmem:[#allocation2 + $0xc] sm:$0xf] %vm49, %v262
    %v264 = vld [vmem:[#allocation2] sm:$0xff]
    %v265 = vld [vmem:[#allocation2 + $0x8] sm:$0xff]
    %v266 = vsel %vm55, %v264, 0.0
    %267 = vadd.xlane.f32.xlu0 %v266
    %v268 = vpop.xlane.xlu0 %267
    %v269 = vsel %vm55, %v268, 0.0
    %v270 = vrot.slane %v269, 4
    %v271 = vadd.f32 %v269, %v270
    %v272 = vrot.slane %v271, 2
    %v273 = vadd.f32 %v271, %v272
    %v274 = vrot.slane %v273, 1
    %v275 = vadd.f32 %v273, %v274
    %v276 = vmul.f32 %v264, %v264
    %v277 = vsel %vm55, %v276, 0.0
    %278 = vadd.xlane.f32.xlu0 %v277
    %v279 = vpop.xlane.xlu0 %278
    %v280 = vsel %vm55, %v279, 0.0
    %v281 = vrot.slane %v280, 4
    %v282 = vadd.f32 %v280, %v281
    %v283 = vrot.slane %v282, 2
    %v284 = vadd.f32 %v282, %v283
    %v285 = vrot.slane %v284, 1
    %v286 = vadd.f32 %v284, %v285
    %v287 = vmul.f32 %v275, 0.015625
    %v288 = vmul.f32 %v286, 0.015625
    %v289 = vmul.f32 %v287, %v287
    %v290 = vsub.f32 %v288, %v289
    %v291 = vadd.f32 %v290, 1e-05
    %v292 = vrsqrt.pop %v291
    %v293 = vmul.f32 %v292, %v39
    %v294 = vmul.f32 %v287, %v293
    %296 = vrot.lane.b32.xlu0 %v294, 1
    %v297 = vpop.permute.xlu0 %296
    %v299 = vsub.f32 %v39, %v297
    %v300 = vsel %vm90, %v264, 0.0
    %301 = vadd.xlane.f32.xlu0 %v300
    %v302 = vpop.xlane.xlu0 %301
    %v304 = vrot.slane %v302, 4
    %v306 = vsel %vm55, %v304, 0.0
    %v307 = vrot.slane %v306, 4
    %v308 = vadd.f32 %v306, %v307
    %v309 = vrot.slane %v308, 2
    %v310 = vadd.f32 %v308, %v309
    %v311 = vrot.slane %v310, 1
    %v312 = vadd.f32 %v310, %v311
    %v313 = vsel %vm90, %v276, 0.0
    %314 = vadd.xlane.f32.xlu0 %v313
    %v315 = vpop.xlane.xlu0 %314
    %v317 = vrot.slane %v315, 4
    %v319 = vsel %vm55, %v317, 0.0
    %v320 = vrot.slane %v319, 4
    %v321 = vadd.f32 %v319, %v320
    %v322 = vrot.slane %v321, 2
    %v323 = vadd.f32 %v321, %v322
    %v324 = vrot.slane %v323, 1
    %v325 = vadd.f32 %v323, %v324
    %v326 = vmul.f32 %v312, 0.015625
    %v327 = vmul.f32 %v325, 0.015625
    %v328 = vmul.f32 %v326, %v326
    %v329 = vsub.f32 %v327, %v328
    %v330 = vadd.f32 %v329, 1e-05
    %v331 = vrsqrt.pop %v330
    %v332 = vmul.f32 %v331, %v39
    %v333 = vmul.f32 %v326, %v332
    %335 = vrot.lane.b32.xlu0 %v333, 1
    %v336 = vpop.permute.xlu0 %335
    %v338 = vsub.f32 %v39, %v336
    %v339 = vsel %vm55, %v265, 0.0
    %340 = vadd.xlane.f32.xlu0 %v339
    %v341 = vpop.xlane.xlu0 %340
    %v342 = vsel %vm55, %v341, 0.0
    %v343 = vrot.slane %v342, 4
    %v344 = vadd.f32 %v342, %v343
    %v345 = vrot.slane %v344, 2
    %v346 = vadd.f32 %v344, %v345
    %v347 = vrot.slane %v346, 1
    %v348 = vadd.f32 %v346, %v347
    %v349 = vmul.f32 %v265, %v265
    %v350 = vsel %vm55, %v349, 0.0
    %351 = vadd.xlane.f32.xlu0 %v350
    %v352 = vpop.xlane.xlu0 %351
    %v353 = vsel %vm55, %v352, 0.0
    %v354 = vrot.slane %v353, 4
    %v355 = vadd.f32 %v353, %v354
    %v356 = vrot.slane %v355, 2
    %v357 = vadd.f32 %v355, %v356
    %v358 = vrot.slane %v357, 1
    %v359 = vadd.f32 %v357, %v358
    %v360 = vmul.f32 %v348, 0.015625
    %v361 = vmul.f32 %v359, 0.015625
    %v362 = vmul.f32 %v360, %v360
    %v363 = vsub.f32 %v361, %v362
    %v364 = vadd.f32 %v363, 1e-05
    %v365 = vrsqrt.pop %v364
    %v366 = vmul.f32 %v365, %v40
    %v367 = vmul.f32 %v360, %v366
    %369 = vrot.lane.b32.xlu0 %v367, 1
    %v370 = vpop.permute.xlu0 %369
    %v372 = vsub.f32 %v40, %v370
    %v373 = vsel %vm90, %v265, 0.0
    %374 = vadd.xlane.f32.xlu0 %v373
    %v375 = vpop.xlane.xlu0 %374
    %v377 = vrot.slane %v375, 4
    %v379 = vsel %vm55, %v377, 0.0
    %v380 = vrot.slane %v379, 4
    %v381 = vadd.f32 %v379, %v380
    %v382 = vrot.slane %v381, 2
    %v383 = vadd.f32 %v381, %v382
    %v384 = vrot.slane %v383, 1
    %v385 = vadd.f32 %v383, %v384
    %v386 = vsel %vm90, %v349, 0.0
    %387 = vadd.xlane.f32.xlu0 %v386
    %v388 = vpop.xlane.xlu0 %387
    %v390 = vrot.slane %v388, 4
    %v392 = vsel %vm55, %v390, 0.0
    %v393 = vrot.slane %v392, 4
    %v394 = vadd.f32 %v392, %v393
    %v395 = vrot.slane %v394, 2
    %v396 = vadd.f32 %v394, %v395
    %v397 = vrot.slane %v396, 1
    %v398 = vadd.f32 %v396, %v397
    %v399 = vmul.f32 %v385, 0.015625
    %v400 = vmul.f32 %v398, 0.015625
    %v401 = vmul.f32 %v399, %v399
    %v402 = vsub.f32 %v400, %v401
    %v403 = vadd.f32 %v402, 1e-05
    %v404 = vrsqrt.pop %v403
    %v405 = vmul.f32 %v404, %v40
    %v406 = vmul.f32 %v399, %v405
    %408 = vrot.lane.b32.xlu0 %v406, 1
    %v409 = vpop.permute.xlu0 %408
    %v411 = vsub.f32 %v40, %v409
    %v412 = vsel %vm55, %v293, %v332
    %v413 = vsel %vm55, %v366, %v405
    %v414 = vsel %vm55, %v299, %v338
    %v415 = vsel %vm55, %v372, %v411
    %417 = vset.pattern.permute.xlu0 0
    %418 = vperm.xlu0 %417, %v412
    %v419 = vpop.permute.xlu0 %418
    %422 = vset.pattern.permute.xlu0 0
    %423 = vperm.xlu0 %422, %v413
    %v424 = vpop.permute.xlu0 %423
    %v426 = vmul.f32 %v264, %v419
    %v427 = vmul.f32 %v265, %v424
    %429 = vset.pattern.permute.xlu0 1
    %430 = vperm.xlu0 %429, %v414
    %v431 = vpop.permute.xlu0 %430
    %434 = vset.pattern.permute.xlu0 1
    %435 = vperm.xlu0 %434, %v415
    %v436 = vpop.permute.xlu0 %435
    %v438 = vadd.f32 %v426, %v431
    %v439 = vadd.f32 %v427, %v436
    %v440 = vxor.u32 %v438, 2147483648
    %v441 = vxor.u32 %v439, 2147483648
    %v442 = vmul.f32 %v440, 1.442695
    %v443 = vpow.pop %v442
    %v444 = vmul.f32 %v441, 1.442695
    %v445 = vpow.pop %v444
    %v446 = vadd.f32 %v443, 1.0
    %v447 = vadd.f32 %v445, 1.0
    %v448 = vrcp.pop %v446
    %v449 = vmul.f32 1.0, %v448
    %v450 = vrcp.pop %v447
    %v451 = vmul.f32 1.0, %v450
    %v452 = vmul.f32 %v438, %v449
    %v453 = vmul.f32 %v439, %v451
    %v454 = vmul.f32 %v452, %v38
    %v455 = vmul.f32 %v453, %v38
    %456 = vrot.lane.b32.xlu0 %v454, 1
    %v457 = vpop.permute.xlu0 %456
    %458 = vrot.lane.b32.xlu0 %v455, 1
    %v459 = vpop.permute.xlu0 %458
    %460 = vrot.lane.b32.xlu0 %v454, 127
    %v461 = vpop.permute.xlu0 %460
    %462 = vrot.lane.b32.xlu0 %v455, 127
    %v463 = vpop.permute.xlu0 %462
    %v464 = vpack.c.bf16 %v250, %v248
    %v465 = vpack.c.bf16 %v459, %v457
    %v466 = vpack.c.bf16 %v246, %v245
    %v467 = vpack.c.bf16 %v455, %v454
    %v468 = vpack.c.bf16 %v254, %v252
    %v469 = vpack.c.bf16 %v463, %v461
    %v470 = vld [vmem:[%s6] sm:$0xf]
    %472 = vset.pattern.permute.xlu0 0
    %473 = vperm.xlu0 %472, %v41
    %v474 = vpop.permute.xlu0 %473
    %vm476 = vcmask 392192
    %v478 = vsel %vm476, %v470, 0
    %480 = vmatprep.subr.bf16.mxu0 %v465
    %481 = vmatpush1.bf16.msra.mxu0 %v464
    %482 = vmatprep.subr.bf16.mxu0 %v467
    %483 = vmatpush1.bf16.msra.mxu0 %v466
    %484 = vmatprep.subr.bf16.mxu0 %v469
    %485 = vmatpush1.bf16.msra.mxu0 %v468
    %486 = vmatprep.subr.bf16.mxu0 0
    %487 = vmatpush1.bf16.msra.mxu0 0
    %488 = vmatprep.subr.bf16.mxu0 0
    %489 = vmatpush1.bf16.msra.mxu0 0
    %490 = vmatprep.subr.bf16.mxu0 0
    %491 = vmatpush1.bf16.msra.mxu0 0
    %492 = vmatprep.subr.bf16.mxu0 0
    %493 = vmatpush1.bf16.msra.mxu0 0
    %494 = vmatprep.subr.bf16.mxu0 0
    %495 = vmatpush1.bf16.msra.mxu0 0
    %496 = vmatprep.subr.bf16.mxu0 0
    %497 = vmatpush1.bf16.msra.mxu0 0
    %498 = vmatprep.subr.bf16.mxu0 0
    %499 = vmatpush1.bf16.msra.mxu0 0
    %500 = vmatprep.subr.bf16.mxu0 0
    %501 = vmatpush1.bf16.msra.mxu0 0
    %502 = vmatprep.subr.bf16.mxu0 0
    %503 = vmatpush1.bf16.msra.mxu0 0
    %504 = vmatprep.subr.bf16.mxu0 0
    %505 = vmatpush1.bf16.msra.mxu0 0
    %506 = vmatprep.subr.bf16.mxu0 0
    %507 = vmatpush1.bf16.msra.mxu0 0
    %508 = vmatprep.subr.bf16.mxu0 0
    %509 = vmatpush1.bf16.msra.mxu0 0
    %510 = vmatprep.subr.bf16.mxu0 0
    %511 = vmatpush1.bf16.msra.mxu0 0
    %512 = vmatprep.mubr.bf16.mxu0 0
    %513 = vmatmul.mubr.bf16.gmra.mrb[0].mxu0 %v478
    %v514 = vpop.f32.mrb[0].mxu0
    %v515 = vadd.f32 %v474, %v514
    %v516 = vpop.f32.mrb[0].mxu0
    %v517 = vadd.f32 %v474, %v516
    %v518 = vpop.f32.mrb[0].mxu0
    %v519 = vpop.f32.mrb[0].mxu0
    %520 = vdwg.mxu0
    %v521 = vld [vmem:[%s3] sm:$0xff]
    %523 = vset.pattern.permute.xlu0 0
    %524 = vperm.xlu0 %523, %v521
    %v525 = vpop.permute.xlu0 %524
    %v527 = vmul.f32 %v515, %v525
    %528 = vset.pattern.permute.xlu0 1
    %529 = vperm.xlu0 %528, %v521
    %v530 = vpop.permute.xlu0 %529
    %v532 = vadd.f32 %v527, %v530
    %v533 = vmul.f32 %v532, %v38
    %v534 = vsel %vm55, %v533, 0.0
    %535 = vadd.xlane.f32.xlu0 %v534
    %v536 = vpop.xlane.xlu0 %535
    %v537 = vsel %vm55, %v536, 0.0
    %v538 = vrot.slane %v537, 4
    %v539 = vadd.f32 %v537, %v538
    %v540 = vrot.slane %v539, 2
    %v541 = vadd.f32 %v539, %v540
    %v542 = vrot.slane %v541, 1
    %v543 = vadd.f32 %v541, %v542
    %v544 = vmul.f32 %v533, %v533
    %v545 = vsel %vm55, %v544, 0.0
    %546 = vadd.xlane.f32.xlu0 %v545
    %v547 = vpop.xlane.xlu0 %546
    %v548 = vsel %vm55, %v547, 0.0
    %v549 = vrot.slane %v548, 4
    %v550 = vadd.f32 %v548, %v549
    %v551 = vrot.slane %v550, 2
    %v552 = vadd.f32 %v550, %v551
    %v553 = vrot.slane %v552, 1
    %v554 = vadd.f32 %v552, %v553
    %v555 = vmul.f32 %v543, 0.015625
    %v556 = vmul.f32 %v554, 0.015625
    %v557 = vmul.f32 %v555, %v555
    %v558 = vsub.f32 %v556, %v557
    %v559 = vadd.f32 %v558, 1e-05
    %v560 = vrsqrt.pop %v559
    %v561 = vmul.f32 %v560, %v41
    %v562 = vmul.f32 %v555, %v561
    %564 = vrot.lane.b32.xlu0 %v562, 1
    %v565 = vpop.permute.xlu0 %564
    %v567 = vsub.f32 %v41, %v565
    %v568 = vsel %vm90, %v533, 0.0
    %569 = vadd.xlane.f32.xlu0 %v568
    %v570 = vpop.xlane.xlu0 %569
    %v572 = vrot.slane %v570, 4
    %v574 = vsel %vm55, %v572, 0.0
    %v575 = vrot.slane %v574, 4
    %v576 = vadd.f32 %v574, %v575
    %v577 = vrot.slane %v576, 2
    %v578 = vadd.f32 %v576, %v577
    %v579 = vrot.slane %v578, 1
    %v580 = vadd.f32 %v578, %v579
    %v581 = vsel %vm90, %v544, 0.0
    %582 = vadd.xlane.f32.xlu0 %v581
    %v583 = vpop.xlane.xlu0 %582
    %v585 = vrot.slane %v583, 4
    %v587 = vsel %vm55, %v585, 0.0
    %v588 = vrot.slane %v587, 4
    %v589 = vadd.f32 %v587, %v588
    %v590 = vrot.slane %v589, 2
    %v591 = vadd.f32 %v589, %v590
    %v592 = vrot.slane %v591, 1
    %v593 = vadd.f32 %v591, %v592
    %v594 = vmul.f32 %v580, 0.015625
    %v595 = vmul.f32 %v593, 0.015625
    %v596 = vmul.f32 %v594, %v594
    %v597 = vsub.f32 %v595, %v596
    %v598 = vadd.f32 %v597, 1e-05
    %v599 = vrsqrt.pop %v598
    %v600 = vmul.f32 %v599, %v41
    %v601 = vmul.f32 %v594, %v600
    %603 = vrot.lane.b32.xlu0 %v601, 1
    %v604 = vpop.permute.xlu0 %603
    %v606 = vsub.f32 %v41, %v604
    %v607 = vsel %vm55, %v561, %v600
    %v608 = vsel %vm55, %v567, %v606
    %610 = vset.pattern.permute.xlu0 1
    %611 = vperm.xlu0 %610, %v607
    %v612 = vpop.permute.xlu0 %611
    %v614 = vmul.f32 %v533, %v612
    %616 = vset.pattern.permute.xlu0 2
    %617 = vperm.xlu0 %616, %v608
    %v618 = vpop.permute.xlu0 %617
    %v620 = vadd.f32 %v614, %v618
    %v621 = vxor.u32 %v620, 2147483648
    %v622 = vmul.f32 %v621, 1.442695
    %v623 = vpow.pop %v622
    %v624 = vadd.f32 %v623, 1.0
    %v625 = vrcp.pop %v624
    %v626 = vmul.f32 1.0, %v625
    %v627 = vmul.f32 %v620, %v626
    %v628 = vmul.f32 %v627, %v38
    %629 = vrot.lane.b32.xlu0 %v628, 1
    %v630 = vpop.permute.xlu0 %629
    %631 = vrot.lane.b32.xlu0 %v628, 127
    %v632 = vpop.permute.xlu0 %631
    %s633 = scalar_lea.vmem %s3, 8
    %v634 = vld [vmem:[%s633] sm:$0xff]
    %636 = vset.pattern.permute.xlu0 0
    %637 = vperm.xlu0 %636, %v634
    %v638 = vpop.permute.xlu0 %637
    %v640 = vmul.f32 %v517, %v638
    %641 = vset.pattern.permute.xlu0 1
    %642 = vperm.xlu0 %641, %v634
    %v643 = vpop.permute.xlu0 %642
    %v645 = vadd.f32 %v640, %v643
    %v646 = vmul.f32 %v645, %v38
    %v647 = vsel %vm55, %v646, 0.0
    %648 = vadd.xlane.f32.xlu0 %v647
    %v649 = vpop.xlane.xlu0 %648
    %v650 = vsel %vm55, %v649, 0.0
    %v651 = vrot.slane %v650, 4
    %v652 = vadd.f32 %v650, %v651
    %v653 = vrot.slane %v652, 2
    %v654 = vadd.f32 %v652, %v653
    %v655 = vrot.slane %v654, 1
    %v656 = vadd.f32 %v654, %v655
    %v657 = vmul.f32 %v646, %v646
    %v658 = vsel %vm55, %v657, 0.0
    %659 = vadd.xlane.f32.xlu0 %v658
    %v660 = vpop.xlane.xlu0 %659
    %v661 = vsel %vm55, %v660, 0.0
    %v662 = vrot.slane %v661, 4
    %v663 = vadd.f32 %v661, %v662
    %v664 = vrot.slane %v663, 2
    %v665 = vadd.f32 %v663, %v664
    %v666 = vrot.slane %v665, 1
    %v667 = vadd.f32 %v665, %v666
    %v668 = vmul.f32 %v656, 0.015625
    %v669 = vmul.f32 %v667, 0.015625
    %v670 = vmul.f32 %v668, %v668
    %v671 = vsub.f32 %v669, %v670
    %v672 = vadd.f32 %v671, 1e-05
    %v673 = vrsqrt.pop %v672
    %v674 = vmul.f32 %v673, %v41
    %v675 = vmul.f32 %v668, %v674
    %677 = vrot.lane.b32.xlu0 %v675, 1
    %v678 = vpop.permute.xlu0 %677
    %v680 = vsub.f32 %v41, %v678
    %v681 = vsel %vm90, %v646, 0.0
    %682 = vadd.xlane.f32.xlu0 %v681
    %v683 = vpop.xlane.xlu0 %682
    %v685 = vrot.slane %v683, 4
    %v687 = vsel %vm55, %v685, 0.0
    %v688 = vrot.slane %v687, 4
    %v689 = vadd.f32 %v687, %v688
    %v690 = vrot.slane %v689, 2
    %v691 = vadd.f32 %v689, %v690
    %v692 = vrot.slane %v691, 1
    %v693 = vadd.f32 %v691, %v692
    %v694 = vsel %vm90, %v657, 0.0
    %695 = vadd.xlane.f32.xlu0 %v694
    %v696 = vpop.xlane.xlu0 %695
    %v698 = vrot.slane %v696, 4
    %v700 = vsel %vm55, %v698, 0.0
    %v701 = vrot.slane %v700, 4
    %v702 = vadd.f32 %v700, %v701
    %v703 = vrot.slane %v702, 2
    %v704 = vadd.f32 %v702, %v703
    %v705 = vrot.slane %v704, 1
    %v706 = vadd.f32 %v704, %v705
    %v707 = vmul.f32 %v693, 0.015625
    %v708 = vmul.f32 %v706, 0.015625
    %v709 = vmul.f32 %v707, %v707
    %v710 = vsub.f32 %v708, %v709
    %v711 = vadd.f32 %v710, 1e-05
    %v712 = vrsqrt.pop %v711
    %v713 = vmul.f32 %v712, %v41
    %v714 = vmul.f32 %v707, %v713
    %716 = vrot.lane.b32.xlu0 %v714, 1
    %v717 = vpop.permute.xlu0 %716
    %v719 = vsub.f32 %v41, %v717
    %v720 = vsel %vm55, %v674, %v713
    %v721 = vsel %vm55, %v680, %v719
    %723 = vset.pattern.permute.xlu0 1
    %724 = vperm.xlu0 %723, %v720
    %v725 = vpop.permute.xlu0 %724
    %v727 = vmul.f32 %v646, %v725
    %729 = vset.pattern.permute.xlu0 2
    %730 = vperm.xlu0 %729, %v721
    %v731 = vpop.permute.xlu0 %730
    %v733 = vadd.f32 %v727, %v731
    %v734 = vxor.u32 %v733, 2147483648
    %v735 = vmul.f32 %v734, 1.442695
    %v736 = vpow.pop %v735
    %v737 = vadd.f32 %v736, 1.0
    %v738 = vrcp.pop %v737
    %v739 = vmul.f32 1.0, %v738
    %v740 = vmul.f32 %v733, %v739
    %v741 = vmul.f32 %v740, %v38
    %742 = vrot.lane.b32.xlu0 %v741, 1
    %v743 = vpop.permute.xlu0 %742
    %744 = vrot.lane.b32.xlu0 %v741, 127
    %v745 = vpop.permute.xlu0 %744
    %v746 = vpack.c.bf16 %v628, %v630
    %v747 = vpack.c.bf16 %v741, %v743
    %v748 = vpack.c.bf16 %v632, %v632
    %v749 = vpack.c.bf16 %v745, %v745
    %v750 = vld [vmem:[%s7] sm:$0xf]
    %751 = vset.pattern.permute.xlu0 3
    %752 = vperm.xlu0 %751, %v41
    %v753 = vpop.permute.xlu0 %752
    %vm755 = vcmask 195584
    %v757 = vsel %vm755, %v750, 0
    %v760 = vsel %vm55, %v748, 0
    %v763 = vsel %vm55, %v749, 0
    %765 = vmatprep.subr.bf16.mxu0 %v747
    %766 = vmatpush1.bf16.msra.mxu0 %v746
    %767 = vmatprep.subr.bf16.mxu0 %v763
    %768 = vmatpush1.bf16.msra.mxu0 %v760
    %769 = vmatprep.subr.bf16.mxu0 0
    %770 = vmatpush1.bf16.msra.mxu0 0
    %771 = vmatprep.subr.bf16.mxu0 0
    %772 = vmatpush1.bf16.msra.mxu0 0
    %773 = vmatprep.subr.bf16.mxu0 0
    %774 = vmatpush1.bf16.msra.mxu0 0
    %775 = vmatprep.subr.bf16.mxu0 0
    %776 = vmatpush1.bf16.msra.mxu0 0
    %777 = vmatprep.subr.bf16.mxu0 0
    %778 = vmatpush1.bf16.msra.mxu0 0
    %779 = vmatprep.subr.bf16.mxu0 0
    %780 = vmatpush1.bf16.msra.mxu0 0
    %781 = vmatprep.subr.bf16.mxu0 0
    %782 = vmatpush1.bf16.msra.mxu0 0
    %783 = vmatprep.subr.bf16.mxu0 0
    %784 = vmatpush1.bf16.msra.mxu0 0
    %785 = vmatprep.subr.bf16.mxu0 0
    %786 = vmatpush1.bf16.msra.mxu0 0
    %787 = vmatprep.subr.bf16.mxu0 0
    %788 = vmatpush1.bf16.msra.mxu0 0
    %789 = vmatprep.subr.bf16.mxu0 0
    %790 = vmatpush1.bf16.msra.mxu0 0
    %791 = vmatprep.subr.bf16.mxu0 0
    %792 = vmatpush1.bf16.msra.mxu0 0
    %793 = vmatprep.subr.bf16.mxu0 0
    %794 = vmatpush1.bf16.msra.mxu0 0
    %795 = vmatprep.subr.bf16.mxu0 0
    %796 = vmatpush1.bf16.msra.mxu0 0
    %797 = vmatprep.mubr.bf16.mxu0 0
    %798 = vmatmul.mubr.bf16.gmra.mrb[0].mxu0 %v757
    %v799 = vpop.f32.mrb[0].mxu0
    %v800 = vadd.f32 %v753, %v799
    %v801 = vpop.f32.mrb[0].mxu0
    %v802 = vadd.f32 %v753, %v801
    %v803 = vpop.f32.mrb[0].mxu0
    %v804 = vpop.f32.mrb[0].mxu0
    %805 = vdwg.mxu0
    %v806 = vld [vmem:[%s8] sm:$0xf]
    %v807 = vld [vmem:[%s0] sm:$0xff]
    %v808 = vpack.c.bf16 %v807, %v807
    %vm809 = vcmask 64512
    %v811 = vsel %vm809, %v806, 0
    %v814 = vsel %vm55, %v808, 0
    %816 = vmatprep.subr.bf16.mxu0 0
    %817 = vmatpush1.bf16.msra.mxu0 %v814
    %818 = vmatprep.subr.bf16.mxu0 0
    %819 = vmatpush1.bf16.msra.mxu0 0
    %820 = vmatprep.subr.bf16.mxu0 0
    %821 = vmatpush1.bf16.msra.mxu0 0
    %822 = vmatprep.subr.bf16.mxu0 0
    %823 = vmatpush1.bf16.msra.mxu0 0
    %824 = vmatprep.subr.bf16.mxu0 0
    %825 = vmatpush1.bf16.msra.mxu0 0
    %826 = vmatprep.subr.bf16.mxu0 0
    %827 = vmatpush1.bf16.msra.mxu0 0
    %828 = vmatprep.subr.bf16.mxu0 0
    %829 = vmatpush1.bf16.msra.mxu0 0
    %830 = vmatprep.subr.bf16.mxu0 0
    %831 = vmatpush1.bf16.msra.mxu0 0
    %832 = vmatprep.subr.bf16.mxu0 0
    %833 = vmatpush1.bf16.msra.mxu0 0
    %834 = vmatprep.subr.bf16.mxu0 0
    %835 = vmatpush1.bf16.msra.mxu0 0
    %836 = vmatprep.subr.bf16.mxu0 0
    %837 = vmatpush1.bf16.msra.mxu0 0
    %838 = vmatprep.subr.bf16.mxu0 0
    %839 = vmatpush1.bf16.msra.mxu0 0
    %840 = vmatprep.subr.bf16.mxu0 0
    %841 = vmatpush1.bf16.msra.mxu0 0
    %842 = vmatprep.subr.bf16.mxu0 0
    %843 = vmatpush1.bf16.msra.mxu0 0
    %844 = vmatprep.subr.bf16.mxu0 0
    %845 = vmatpush1.bf16.msra.mxu0 0
    %846 = vmatprep.subr.bf16.mxu0 0
    %847 = vmatpush1.bf16.msra.mxu0 0
    %848 = vmatprep.mubr.bf16.mxu0 0
    %849 = vmatmul.mubr.bf16.gmra.mrb[0].mxu0 %v811
    %v850 = vpop.f32.mrb[0].mxu0
    %v851 = vadd.f32 0.0, %v850
    %v852 = vpop.f32.mrb[0].mxu0
    %v853 = vpop.f32.mrb[0].mxu0
    %v854 = vpop.f32.mrb[0].mxu0
    %855 = vdwg.mxu0
    %v856 = vadd.f32 %v800, %v851
    %857 = vset.pattern.permute.xlu0 4
    %858 = vperm.xlu0 %857, %v41
    %v859 = vpop.permute.xlu0 %858
    %v861 = vadd.f32 %v856, %v859
    %862 = vst.msk [vmem:[#allocation3] sm:$0xff] %vm46, %v861
    %v863 = vld [vmem:[%s8] sm:$0xf]
    %v864 = vld [vmem:[%s255] sm:$0xff]
    %v865 = vpack.c.bf16 %v864, %v864
    %v867 = vsel %vm809, %v863, 0
    %v870 = vsel %vm55, %v865, 0
    %872 = vmatprep.subr.bf16.mxu0 0
    %873 = vmatpush1.bf16.msra.mxu0 %v870
    %874 = vmatprep.subr.bf16.mxu0 0
    %875 = vmatpush1.bf16.msra.mxu0 0
    %876 = vmatprep.subr.bf16.mxu0 0
    %877 = vmatpush1.bf16.msra.mxu0 0
    %878 = vmatprep.subr.bf16.mxu0 0
    %879 = vmatpush1.bf16.msra.mxu0 0
    %880 = vmatprep.subr.bf16.mxu0 0
    %881 = vmatpush1.bf16.msra.mxu0 0
    %882 = vmatprep.subr.bf16.mxu0 0
    %883 = vmatpush1.bf16.msra.mxu0 0
    %884 = vmatprep.subr.bf16.mxu0 0
    %885 = vmatpush1.bf16.msra.mxu0 0
    %886 = vmatprep.subr.bf16.mxu0 0
    %887 = vmatpush1.bf16.msra.mxu0 0
    %888 = vmatprep.subr.bf16.mxu0 0
    %889 = vmatpush1.bf16.msra.mxu0 0
    %890 = vmatprep.subr.bf16.mxu0 0
    %891 = vmatpush1.bf16.msra.mxu0 0
    %892 = vmatprep.subr.bf16.mxu0 0
    %893 = vmatpush1.bf16.msra.mxu0 0
    %894 = vmatprep.subr.bf16.mxu0 0
    %895 = vmatpush1.bf16.msra.mxu0 0
    %896 = vmatprep.subr.bf16.mxu0 0
    %897 = vmatpush1.bf16.msra.mxu0 0
    %898 = vmatprep.subr.bf16.mxu0 0
    %899 = vmatpush1.bf16.msra.mxu0 0
    %900 = vmatprep.subr.bf16.mxu0 0
    %901 = vmatpush1.bf16.msra.mxu0 0
    %902 = vmatprep.subr.bf16.mxu0 0
    %903 = vmatpush1.bf16.msra.mxu0 0
    %904 = vmatprep.mubr.bf16.mxu0 0
    %905 = vmatmul.mubr.bf16.gmra.mrb[0].mxu0 %v867
    %v906 = vpop.f32.mrb[0].mxu0
    %v907 = vadd.f32 0.0, %v906
    %v908 = vpop.f32.mrb[0].mxu0
    %v909 = vpop.f32.mrb[0].mxu0
    %v910 = vpop.f32.mrb[0].mxu0
    %911 = vdwg.mxu0
    %v912 = vadd.f32 %v802, %v907
    %v913 = vadd.f32 %v912, %v859
    %s914 = scalar_lea.vmem [#allocation3], 8
    %915 = vst.msk [vmem:[%s914] sm:$0xff] %vm46, %v913
    // Predicated region
    $region38: #{_lambda_.1} parent=1 // pred_check
      _
    $region39: #{_lambda_.1} parent=1 // pred_check_branch
      %917 = sbr.rel (0) target = $region41
    $region40: #{_lambda_.1} parent=1 // pred_region
      %s919 = ssub.s32 256, 256
      %920 = vsyncadd [#allocation4], %s919
      %s921 = sshll.u32 [#allocation3], 4
      %s922 = int_to_ptr.vmem [resolvable:$true] %s921
      %927 = dma.vmem_to_hbm [thread:$0]  %s922, 256, %s9, [#allocation4], 128, 128, 8
    $region41: #{_lambda_.1} parent=1 // pred_fallthru
      _
    // Predicated region
    $region42: #{_lambda_.1} parent=1 // pred_check
      _
    $region43: #{_lambda_.1} parent=1 // pred_check_branch
      %929 = sbr.rel (0) target = $region45
    $region44: #{_lambda_.1} parent=1 // pred_region
      %930 = dma.done [#allocation4], 256
    $region45: #{_lambda_.1} parent=1 // pred_fallthru
      _
    %931 = vsyncpa [#allocation4], 1

</llo_original>
